<compile_context>
chip_gen: v6e
topology: v6e:2x2x1
jax: 0.10.0
libtpu: 0.0.40
codegen_flags: <defaults>
</compile_context>

<pallas_src>
import functools

import jax
import jax.numpy as jnp
import numpy as np
from jax.experimental import pallas as pl
from jax.experimental.pallas import tpu as pltpu

# ---------------- small synthetic config ----------------
VOCAB = 64
MAX_POS = 16
HIDDEN = 32
N_HEADS = 2
HEAD_DIM = HIDDEN // N_HEADS
FFN = 64
N_LAYERS = 2
BATCH = 2
SEQ = 8
LN_EPS_BERT = 1e-12   # BERT LayerNorm eps
LN_EPS_HEAD = 1e-5    # nn.LayerNorm default eps (custom head)
MASK_NEG = -1e9

F32 = jnp.float32
BF16 = jnp.bfloat16

# rows of the packed per-layer vector table `lvec` (shape (L, 6, HIDDEN))
ROW_BO, ROW_LN1G, ROW_LN1B, ROW_B2, ROW_LN2G, ROW_LN2B = range(6)


# ---------------- kernel ----------------
def _ln(h, g, b, eps):
    mu = jnp.mean(h, axis=-1, keepdims=True)
    var = jnp.mean(jnp.square(h - mu), axis=-1, keepdims=True)
    return (h - mu) * jax.lax.rsqrt(var + eps) * g + b


def _encoder_kernel(x_ref, m_ref, embln_ref, wqkv_ref, bqkv_ref, wo_ref,
                    lvec_ref, w1_ref, b1_ref, w2_ref,
                    hln_ref, hw_ref, hb_ref, o_ref, x_scr):
    """Grid = (batch, layer). One batch element, one transformer layer per step.

    Per-layer weights are streamed (layer-indexed BlockSpecs); the activation
    (SEQ, HIDDEN) is carried across layer steps in the x_scr VMEM scratch.
    """
    layer = pl.program_id(1)
    scale = 1.0 / (HEAD_DIM ** 0.5)

    # --- first layer step: embedding LayerNorm (no residual) into the scratch ---
    @pl.when(layer == 0)
    def _():
        x_scr[...] = _ln(x_ref[0], embln_ref[0:1, :], embln_ref[1:2, :],
                         LN_EPS_BERT)

    x = x_scr[...]                      # (S, H) f32 carried activation
    xb = x.astype(BF16)                 # bf16 MXU inputs, f32 accumulation
    mask = m_ref[0]                     # (1, S) additive key-padding mask
    lv = lvec_ref[0]                    # (6, H) packed per-layer vectors

    # --- self-attention: per-head weight slices, per-head output accumulation ---
    attn = jnp.zeros((SEQ, HIDDEN), F32)
    for h in range(N_HEADS):            # static, tiny head loop
        q = (jnp.dot(xb, wqkv_ref[0, 0 * N_HEADS + h],
                     preferred_element_type=F32) + bqkv_ref[0, 0 * N_HEADS + h])
        k = (jnp.dot(xb, wqkv_ref[0, 1 * N_HEADS + h],
                     preferred_element_type=F32) + bqkv_ref[0, 1 * N_HEADS + h])
        v = (jnp.dot(xb, wqkv_ref[0, 2 * N_HEADS + h],
                     preferred_element_type=F32) + bqkv_ref[0, 2 * N_HEADS + h])
        s = jnp.einsum('qd,kd->qk', q.astype(BF16), k.astype(BF16),
                       preferred_element_type=F32) * scale + mask
        s = s - jnp.max(s, axis=-1, keepdims=True)
        p = jnp.exp(s)                                       # EUP
        denom = jnp.sum(p, axis=-1, keepdims=True)
        ctx = jnp.dot(p.astype(BF16), v.astype(BF16),
                      preferred_element_type=F32)
        ctx = ctx * pl.reciprocal(denom, approx=True)        # EUP, deferred norm
        attn = attn + jnp.dot(ctx.astype(BF16), wo_ref[0, h],
                              preferred_element_type=F32)

    attn = attn + lv[ROW_BO:ROW_BO + 1, :]
    x = _ln(attn + x, lv[ROW_LN1G:ROW_LN1G + 1, :],
            lv[ROW_LN1B:ROW_LN1B + 1, :], LN_EPS_BERT)

    # --- feed-forward ---
    inter = jnp.dot(x.astype(BF16), w1_ref[0],
                    preferred_element_type=F32) + b1_ref[0]
    # TODO(synk): HF BERT uses exact (erf) GELU; tanh approximation used here.
    inter = jax.nn.gelu(inter, approximate=True)
    ffn = jnp.dot(inter.astype(BF16), w2_ref[0],
                  preferred_element_type=F32) + lv[ROW_B2:ROW_B2 + 1, :]
    x = _ln(ffn + x, lv[ROW_LN2G:ROW_LN2G + 1, :],
            lv[ROW_LN2B:ROW_LN2B + 1, :], LN_EPS_BERT)
    x_scr[...] = x

    # --- last layer step: pooled CLS row + custom head ---
    @pl.when(layer == N_LAYERS - 1)
    def _():
        pooled = x[0:1, :]                                   # CLS row, (1, H)
        hn = _ln(pooled, hln_ref[0:1, :], hln_ref[1:2, :], LN_EPS_HEAD)
        # dropout is identity at inference
        o_ref[0] = (jnp.dot(hn.astype(BF16), hw_ref[...],
                            preferred_element_type=F32)
                    + hb_ref[...] + pooled)


# ---------------- pallas_call wrapper ----------------
def dpr_encoder_call(x_emb, amask, params):
    def layer_spec(arr):   # stream one layer's slab per grid step
        nz = arr.ndim - 1
        return pl.BlockSpec((1,) + arr.shape[1:],
                            lambda b, l, _n=nz: (l,) + (0,) * _n)

    def batch_spec(arr):   # one batch element per outer grid step
        nz = arr.ndim - 1
        return pl.BlockSpec((1,) + arr.shape[1:],
                            lambda b, l, _n=nz: (b,) + (0,) * _n)

    def full_spec(arr):    # small arrays, resident
        nd = arr.ndim
        return pl.BlockSpec(arr.shape, lambda b, l, _n=nd: (0,) * _n)

    in_specs = [
        batch_spec(x_emb),
        batch_spec(amask),
        full_spec(params["emb_ln"]),
        layer_spec(params["wqkv"]),
        layer_spec(params["bqkv"]),
        layer_spec(params["wo"]),
        layer_spec(params["lvec"]),
        layer_spec(params["w1"]),
        layer_spec(params["b1"]),
        layer_spec(params["w2"]),
        full_spec(params["head_ln"]),
        full_spec(params["head_w"]),
        full_spec(params["head_b"]),
    ]

    grid_spec = pltpu.PrefetchScalarGridSpec(
        num_scalar_prefetch=0,
        grid=(BATCH, N_LAYERS),
        in_specs=in_specs,
        out_specs=pl.BlockSpec((1, 1, HIDDEN), lambda b, l: (b, 0, 0)),
        scratch_shapes=[pltpu.VMEM((SEQ, HIDDEN), F32)],
    )

    out = pl.pallas_call(
        _encoder_kernel,
        out_shape=jax.ShapeDtypeStruct((BATCH, 1, HIDDEN), F32),
        grid_spec=grid_spec,
        compiler_params=pltpu.CompilerParams(
            dimension_semantics=("parallel", "arbitrary")),
    )(x_emb, amask, params["emb_ln"], params["wqkv"], params["bqkv"],
      params["wo"], params["lvec"], params["w1"], params["b1"], params["w2"],
      params["head_ln"], params["head_w"], params["head_b"])
    return out.reshape(BATCH, HIDDEN)


# ---------------- parameters (deterministic synthetic init) ----------------
def init_params(key):
    keys = jax.random.split(key, 8)
    std = 0.02

    def nrm(k, shape, dtype=F32):
        return (jax.random.normal(k, shape, F32) * std).astype(dtype)

    # Custom head linear: kaiming_normal_(fan_in, leaky_relu, a=0.01), zero bias.
    a = 0.01
    kaiming_std = (2.0 / (1.0 + a * a)) ** 0.5 / (HIDDEN ** 0.5)

    # packed per-layer vectors: [bo, ln1_g, ln1_b, b2, ln2_g, ln2_b]
    lvec = jnp.zeros((N_LAYERS, 6, HIDDEN), F32)
    lvec = lvec.at[:, ROW_LN1G, :].set(1.0)
    lvec = lvec.at[:, ROW_LN2G, :].set(1.0)

    ln_pair = jnp.stack([jnp.ones((HIDDEN,), F32), jnp.zeros((HIDDEN,), F32)])

    return {
        "word_emb": nrm(keys[0], (VOCAB, HIDDEN)),
        "pos_emb": nrm(keys[1], (MAX_POS, HIDDEN)),
        "type_emb": nrm(keys[2], (2, HIDDEN)),
        "emb_ln": ln_pair,                                   # (2, H): [gamma; beta]
        # per-layer, per-head weight layout; bf16 MXU inputs
        "wqkv": nrm(keys[3], (N_LAYERS, 3 * N_HEADS, HIDDEN, HEAD_DIM), BF16),
        "bqkv": jnp.zeros((N_LAYERS, 3 * N_HEADS, 1, HEAD_DIM), F32),
        "wo": nrm(keys[4], (N_LAYERS, N_HEADS, HEAD_DIM, HIDDEN), BF16),
        "lvec": lvec,                                        # (L, 6, H)
        "w1": nrm(keys[5], (N_LAYERS, HIDDEN, FFN), BF16),
        "b1": jnp.zeros((N_LAYERS, 1, FFN), F32),
        "w2": nrm(keys[6], (N_LAYERS, FFN, HIDDEN), BF16),
        "head_ln": ln_pair,                                  # (2, H)
        "head_w": (jax.random.normal(keys[7], (HIDDEN, HIDDEN), F32)
                   * kaiming_std).astype(BF16),
        "head_b": jnp.zeros((1, HIDDEN), F32),
    }


# ---------------- forward (JAX glue: gathers + additive mask, then kernel) ----------------
def forward(params, input_ids, attention_mask):
    B, S = input_ids.shape
    x = (params["word_emb"][input_ids]
         + params["pos_emb"][None, :S, :]
         + params["type_emb"][0][None, None, :]).astype(F32)          # (B, S, H)
    amask = ((1.0 - attention_mask.astype(F32)) * MASK_NEG)[:, None, :]  # (B, 1, S)
    return dpr_encoder_call(x, amask, params)


# ---------------- pure-JAX reference (same math, exact softmax division) ----------------
def reference_forward(params, input_ids, attention_mask):
    B, S = input_ids.shape

    def ln(h, g, b, eps):
        mu = h.mean(-1, keepdims=True)
        var = ((h - mu) ** 2).mean(-1, keepdims=True)
        return (h - mu) / jnp.sqrt(var + eps) * g + b

    x = (params["word_emb"][input_ids]
         + params["pos_emb"][None, :S, :]
         + params["type_emb"][0][None, None, :]).astype(F32)
    x = ln(x, params["emb_ln"][0], params["emb_ln"][1], LN_EPS_BERT)
    am = (1.0 - attention_mask.astype(F32)) * MASK_NEG
    scale = 1.0 / (HEAD_DIM ** 0.5)
    lvec = params["lvec"]

    for l in range(N_LAYERS):
        xb = x.astype(BF16)
        attn = jnp.zeros_like(x)
        for h in range(N_HEADS):
            q = jnp.einsum('bsh,hd->bsd', xb, params["wqkv"][l, 0 * N_HEADS + h],
                           preferred_element_type=F32) + params["bqkv"][l, 0 * N_HEADS + h, 0]
            k = jnp.einsum('bsh,hd->bsd', xb, params["wqkv"][l, 1 * N_HEADS + h],
                           preferred_element_type=F32) + params["bqkv"][l, 1 * N_HEADS + h, 0]
            v = jnp.einsum('bsh,hd->bsd', xb, params["wqkv"][l, 2 * N_HEADS + h],
                           preferred_element_type=F32) + params["bqkv"][l, 2 * N_HEADS + h, 0]
            s = jnp.einsum('bqd,bkd->bqk', q.astype(BF16), k.astype(BF16),
                           preferred_element_type=F32) * scale + am[:, None, :]
            s = s - s.max(-1, keepdims=True)
            p = jnp.exp(s)
            ctx = jnp.einsum('bqk,bkd->bqd', p.astype(BF16), v.astype(BF16),
                             preferred_element_type=F32) / p.sum(-1, keepdims=True)
            attn = attn + jnp.einsum('bsd,dh->bsh', ctx.astype(BF16),
                                     params["wo"][l, h], preferred_element_type=F32)
        attn = attn + lvec[l, ROW_BO]
        x = ln(attn + x, lvec[l, ROW_LN1G], lvec[l, ROW_LN1B], LN_EPS_BERT)
        inter = jnp.einsum('bsh,hf->bsf', x.astype(BF16), params["w1"][l],
                           preferred_element_type=F32) + params["b1"][l, 0]
        inter = jax.nn.gelu(inter, approximate=True)
        ffn = jnp.einsum('bsf,fh->bsh', inter.astype(BF16), params["w2"][l],
                         preferred_element_type=F32) + lvec[l, ROW_B2]
        x = ln(ffn + x, lvec[l, ROW_LN2G], lvec[l, ROW_LN2B], LN_EPS_BERT)

    pooled = x[:, 0, :]
    hn = ln(pooled, params["head_ln"][0], params["head_ln"][1], LN_EPS_HEAD)
    return (jnp.dot(hn.astype(BF16), params["head_w"],
                    preferred_element_type=F32) + params["head_b"][0] + pooled)


if __name__ == "__main__":
    key = jax.random.PRNGKey(0)
    pkey, ikey = jax.random.split(key)
    params = init_params(pkey)

    input_ids = jax.random.randint(ikey, (BATCH, SEQ), 0, VOCAB, dtype=jnp.int32)
    attention_mask = jnp.ones((BATCH, SEQ), dtype=jnp.int32)
    attention_mask = attention_mask.at[1, SEQ - 2:].set(0)   # pad tail of example 1

    out = jax.jit(functools.partial(forward, params))(input_ids, attention_mask)
    out = jax.block_until_ready(out)

    assert out.shape == (BATCH, HIDDEN) and out.dtype == jnp.float32
    assert bool(jnp.all(jnp.isfinite(out)))

    ref = reference_forward(params, input_ids, attention_mask)
    np.testing.assert_allclose(np.asarray(out), np.asarray(ref),
                               rtol=1e-2, atol=1e-2)
    print("KERNEL_OK")
</pallas_src>

<mosaic_0001>
module attributes {stable_mosaic.version = 11 : i64} {
  func.func @_encoder_kernel(%arg0: i32, %arg1: i32, %arg2: memref<1x8x32xf32, #tpu.memory_space<vmem>>, %arg3: memref<1x1x8xf32, #tpu.memory_space<vmem>>, %arg4: memref<2x32xf32, #tpu.memory_space<vmem>>, %arg5: memref<1x6x32x16xbf16, #tpu.memory_space<vmem>>, %arg6: memref<1x6x1x16xf32, #tpu.memory_space<vmem>>, %arg7: memref<1x2x16x32xbf16, #tpu.memory_space<vmem>>, %arg8: memref<1x6x32xf32, #tpu.memory_space<vmem>>, %arg9: memref<1x32x64xbf16, #tpu.memory_space<vmem>>, %arg10: memref<1x1x64xf32, #tpu.memory_space<vmem>>, %arg11: memref<1x64x32xbf16, #tpu.memory_space<vmem>>, %arg12: memref<2x32xf32, #tpu.memory_space<vmem>>, %arg13: memref<32x32xbf16, #tpu.memory_space<vmem>>, %arg14: memref<1x32xf32, #tpu.memory_space<vmem>>, %arg15: memref<1x1x32xf32, #tpu.memory_space<vmem>>, %arg16: memref<8x32xf32, #tpu.memory_space<vmem>>) attributes {dimension_semantics = [#tpu.dimension_semantics<parallel>, #tpu.dimension_semantics<arbitrary>], iteration_bounds = array<i64: 2, 2>, scalar_prefetch = 0 : i64, scratch_operands = 1 : i64, tpu.core_type = #tpu.core_type<tc>, window_params = [{transform_indices = @transform_0, window_bounds = array<i64: 1, 8, 32>}, {transform_indices = @transform_1, window_bounds = array<i64: 1, 1, 8>}, {pipeline_mode = #tpu.pipeline_mode<synchronous>, transform_indices = @transform_2, window_bounds = array<i64: 2, 32>}, {transform_indices = @transform_3, window_bounds = array<i64: 1, 6, 32, 16>}, {transform_indices = @transform_4, window_bounds = array<i64: 1, 6, 1, 16>}, {transform_indices = @transform_5, window_bounds = array<i64: 1, 2, 16, 32>}, {transform_indices = @transform_6, window_bounds = array<i64: 1, 6, 32>}, {transform_indices = @transform_7, window_bounds = array<i64: 1, 32, 64>}, {transform_indices = @transform_8, window_bounds = array<i64: 1, 1, 64>}, {transform_indices = @transform_9, window_bounds = array<i64: 1, 64, 32>}, {pipeline_mode = #tpu.pipeline_mode<synchronous>, transform_indices = @transform_10, window_bounds = array<i64: 2, 32>}, {pipeline_mode = #tpu.pipeline_mode<synchronous>, transform_indices = @transform_11, window_bounds = array<i64: 32, 32>}, {pipeline_mode = #tpu.pipeline_mode<synchronous>, transform_indices = @transform_12, window_bounds = array<i64: 1, 32>}, {transform_indices = @transform_13, window_bounds = array<i64: 1, 1, 32>}]} {
    %c0_i32 = arith.constant 0 : i32
    %0 = arith.cmpi eq, %arg1, %c0_i32 : i32
    %1 = arith.extui %0 : i1 to i32
    %c0_i32_0 = arith.constant 0 : i32
    %2 = arith.cmpi ne, %1, %c0_i32_0 : i32
    scf.if %2 {
      %c0_105 = arith.constant 0 : index
      %c0_106 = arith.constant 0 : index
      %c0_107 = arith.constant 0 : index
      %187 = vector.load %arg2[%c0_105, %c0_106, %c0_107] : memref<1x8x32xf32, #tpu.memory_space<vmem>>, vector<1x8x32xf32>
      %188 = vector.shape_cast %187 : vector<1x8x32xf32> to vector<8x32xf32>
      %c0_108 = arith.constant 0 : index
      %c0_109 = arith.constant 0 : index
      %189 = vector.load %arg4[%c0_108, %c0_109] : memref<2x32xf32, #tpu.memory_space<vmem>>, vector<1x32xf32>
      %c1_110 = arith.constant 1 : index
      %c0_111 = arith.constant 0 : index
      %190 = vector.load %arg4[%c1_110, %c0_111] : memref<2x32xf32, #tpu.memory_space<vmem>>, vector<1x32xf32>
      %cst_112 = arith.constant dense<0.000000e+00> : vector<8xf32>
      %191 = vector.multi_reduction <add>, %188, %cst_112 [1] : vector<8x32xf32> to vector<8xf32>
      %192 = vector.shape_cast %191 : vector<8xf32> to vector<8x1xf32>
      %cst_113 = arith.constant 3.200000e+01 : f32
      %193 = vector.broadcast %cst_113 : f32 to vector<8x1xf32>
      %194 = arith.divf %192, %193 : vector<8x1xf32>
      %195 = vector.broadcast %194 : vector<8x1xf32> to vector<8x32xf32>
      %196 = arith.subf %188, %195 : vector<8x32xf32>
      %197 = arith.mulf %196, %196 : vector<8x32xf32>
      %cst_114 = arith.constant dense<0.000000e+00> : vector<8xf32>
      %198 = vector.multi_reduction <add>, %197, %cst_114 [1] : vector<8x32xf32> to vector<8xf32>
      %199 = vector.shape_cast %198 : vector<8xf32> to vector<8x1xf32>
      %cst_115 = arith.constant 3.200000e+01 : f32
      %200 = vector.broadcast %cst_115 : f32 to vector<8x1xf32>
      %201 = arith.divf %199, %200 : vector<8x1xf32>
      %202 = vector.broadcast %194 : vector<8x1xf32> to vector<8x32xf32>
      %203 = arith.subf %188, %202 : vector<8x32xf32>
      %cst_116 = arith.constant 9.99999996E-13 : f32
      %204 = vector.broadcast %cst_116 : f32 to vector<8x1xf32>
      %205 = arith.addf %201, %204 : vector<8x1xf32>
      %206 = math.rsqrt %205 : vector<8x1xf32>
      %207 = vector.broadcast %206 : vector<8x1xf32> to vector<8x32xf32>
      %208 = arith.mulf %203, %207 : vector<8x32xf32>
      %209 = vector.broadcast %189 : vector<1x32xf32> to vector<8x32xf32>
      %210 = arith.mulf %208, %209 : vector<8x32xf32>
      %211 = vector.broadcast %190 : vector<1x32xf32> to vector<8x32xf32>
      %212 = arith.addf %210, %211 : vector<8x32xf32>
      %c0_117 = arith.constant 0 : index
      %c0_118 = arith.constant 0 : index
      %213 = vector.load %arg16[%c0_117, %c0_118] : memref<8x32xf32, #tpu.memory_space<vmem>>, vector<8x32xf32>
      tpu.vector_store %arg16[%c0_117, %c0_118], %212 {strides = array<i32>} : memref<8x32xf32, #tpu.memory_space<vmem>>, vector<8x32xf32>,
    } else {
    }
    %c0 = arith.constant 0 : index
    %c0_1 = arith.constant 0 : index
    %3 = vector.load %arg16[%c0, %c0_1] : memref<8x32xf32, #tpu.memory_space<vmem>>, vector<8x32xf32>
    %4 = arith.truncf %3 : vector<8x32xf32> to vector<8x32xbf16>
    %c0_2 = arith.constant 0 : index
    %c0_3 = arith.constant 0 : index
    %c0_4 = arith.constant 0 : index
    %5 = vector.load %arg3[%c0_2, %c0_3, %c0_4] : memref<1x1x8xf32, #tpu.memory_space<vmem>>, vector<1x1x8xf32>
    %6 = vector.shape_cast %5 : vector<1x1x8xf32> to vector<1x8xf32>
    %c0_5 = arith.constant 0 : index
    %c0_6 = arith.constant 0 : index
    %c0_7 = arith.constant 0 : index
    %7 = vector.load %arg8[%c0_5, %c0_6, %c0_7] : memref<1x6x32xf32, #tpu.memory_space<vmem>>, vector<1x6x32xf32>
    %8 = vector.shape_cast %7 : vector<1x6x32xf32> to vector<6x32xf32>
    %cst = arith.constant 0.000000e+00 : f32
    %9 = vector.broadcast %cst : f32 to vector<8x32xf32>
    %c0_8 = arith.constant 0 : index
    %c0_9 = arith.constant 0 : index
    %c0_10 = arith.constant 0 : index
    %c0_11 = arith.constant 0 : index
    %10 = vector.load %arg5[%c0_8, %c0_9, %c0_10, %c0_11] : memref<1x6x32x16xbf16, #tpu.memory_space<vmem>>, vector<1x1x32x16xbf16>
    %11 = vector.shape_cast %10 : vector<1x1x32x16xbf16> to vector<32x16xbf16>
    %cst_12 = arith.constant dense<0.000000e+00> : vector<8x16xf32>
    %12 = tpu.matmul %4, %11, %cst_12 {dimension_numbers = #tpu.dot_dimension_numbers<[1], [0], [0], [1], [0, 0, 1, 1], [], []>} : vector<8x32xbf16>, vector<32x16xbf16>, vector<8x16xf32> -> vector<8x16xf32>
    %c0_13 = arith.constant 0 : index
    %c0_14 = arith.constant 0 : index
    %c0_15 = arith.constant 0 : index
    %c0_16 = arith.constant 0 : index
    %13 = vector.load %arg6[%c0_13, %c0_14, %c0_15, %c0_16] : memref<1x6x1x16xf32, #tpu.memory_space<vmem>>, vector<1x1x1x16xf32>
    %14 = vector.shape_cast %13 : vector<1x1x1x16xf32> to vector<1x16xf32>
    %15 = vector.broadcast %14 : vector<1x16xf32> to vector<8x16xf32>
    %16 = arith.addf %12, %15 : vector<8x16xf32>
    %c0_17 = arith.constant 0 : index
    %c2 = arith.constant 2 : index
    %c0_18 = arith.constant 0 : index
    %c0_19 = arith.constant 0 : index
    %17 = vector.load %arg5[%c0_17, %c2, %c0_18, %c0_19] : memref<1x6x32x16xbf16, #tpu.memory_space<vmem>>, vector<1x1x32x16xbf16>
    %18 = vector.shape_cast %17 : vector<1x1x32x16xbf16> to vector<32x16xbf16>
    %cst_20 = arith.constant dense<0.000000e+00> : vector<8x16xf32>
    %19 = tpu.matmul %4, %18, %cst_20 {dimension_numbers = #tpu.dot_dimension_numbers<[1], [0], [0], [1], [0, 0, 1, 1], [], []>} : vector<8x32xbf16>, vector<32x16xbf16>, vector<8x16xf32> -> vector<8x16xf32>
    %c0_21 = arith.constant 0 : index
    %c2_22 = arith.constant 2 : index
    %c0_23 = arith.constant 0 : index
    %c0_24 = arith.constant 0 : index
    %20 = vector.load %arg6[%c0_21, %c2_22, %c0_23, %c0_24] : memref<1x6x1x16xf32, #tpu.memory_space<vmem>>, vector<1x1x1x16xf32>
    %21 = vector.shape_cast %20 : vector<1x1x1x16xf32> to vector<1x16xf32>
    %22 = vector.broadcast %21 : vector<1x16xf32> to vector<8x16xf32>
    %23 = arith.addf %19, %22 : vector<8x16xf32>
    %c0_25 = arith.constant 0 : index
    %c4 = arith.constant 4 : index
    %c0_26 = arith.constant 0 : index
    %c0_27 = arith.constant 0 : index
    %24 = vector.load %arg5[%c0_25, %c4, %c0_26, %c0_27] : memref<1x6x32x16xbf16, #tpu.memory_space<vmem>>, vector<1x1x32x16xbf16>
    %25 = vector.shape_cast %24 : vector<1x1x32x16xbf16> to vector<32x16xbf16>
    %cst_28 = arith.constant dense<0.000000e+00> : vector<8x16xf32>
    %26 = tpu.matmul %4, %25, %cst_28 {dimension_numbers = #tpu.dot_dimension_numbers<[1], [0], [0], [1], [0, 0, 1, 1], [], []>} : vector<8x32xbf16>, vector<32x16xbf16>, vector<8x16xf32> -> vector<8x16xf32>
    %c0_29 = arith.constant 0 : index
    %c4_30 = arith.constant 4 : index
    %c0_31 = arith.constant 0 : index
    %c0_32 = arith.constant 0 : index
    %27 = vector.load %arg6[%c0_29, %c4_30, %c0_31, %c0_32] : memref<1x6x1x16xf32, #tpu.memory_space<vmem>>, vector<1x1x1x16xf32>
    %28 = vector.shape_cast %27 : vector<1x1x1x16xf32> to vector<1x16xf32>
    %29 = vector.broadcast %28 : vector<1x16xf32> to vector<8x16xf32>
    %30 = arith.addf %26, %29 : vector<8x16xf32>
    %31 = arith.truncf %16 : vector<8x16xf32> to vector<8x16xbf16>
    %32 = arith.truncf %23 : vector<8x16xf32> to vector<8x16xbf16>
    "tpu.trace_start"() <{level = 10 : i32, message = "qd,kd->qk"}> : () -> ()
    %cst_33 = arith.constant dense<0.000000e+00> : vector<8x8xf32>
    %33 = tpu.matmul %31, %32, %cst_33 {dimension_numbers = #tpu.dot_dimension_numbers<[1], [1], [0], [0], [0, 0, 1, 0], [], []>} : vector<8x16xbf16>, vector<8x16xbf16>, vector<8x8xf32> -> vector<8x8xf32>
    "tpu.trace_stop"() : () -> ()
    %cst_34 = arith.constant 2.500000e-01 : f32
    %34 = vector.broadcast %cst_34 : f32 to vector<8x8xf32>
    %35 = arith.mulf %33, %34 : vector<8x8xf32>
    %36 = vector.broadcast %6 : vector<1x8xf32> to vector<8x8xf32>
    %37 = arith.addf %35, %36 : vector<8x8xf32>
    %cst_35 = arith.constant dense<0xFF800000> : vector<8xf32>
    %38 = vector.multi_reduction <maximumf>, %37, %cst_35 [1] : vector<8x8xf32> to vector<8xf32>
    %39 = vector.shape_cast %38 : vector<8xf32> to vector<8x1xf32>
    %40 = vector.broadcast %39 : vector<8x1xf32> to vector<8x8xf32>
    %41 = arith.subf %37, %40 : vector<8x8xf32>
    %42 = math.exp %41 : vector<8x8xf32>
    %cst_36 = arith.constant dense<0.000000e+00> : vector<8xf32>
    %43 = vector.multi_reduction <add>, %42, %cst_36 [1] : vector<8x8xf32> to vector<8xf32>
    %44 = vector.shape_cast %43 : vector<8xf32> to vector<8x1xf32>
    %45 = arith.truncf %42 : vector<8x8xf32> to vector<8x8xbf16>
    %46 = arith.truncf %30 : vector<8x16xf32> to vector<8x16xbf16>
    %cst_37 = arith.constant dense<0.000000e+00> : vector<8x16xf32>
    %47 = tpu.matmul %45, %46, %cst_37 {dimension_numbers = #tpu.dot_dimension_numbers<[1], [0], [0], [1], [0, 0, 1, 1], [], []>} : vector<8x8xbf16>, vector<8x16xbf16>, vector<8x16xf32> -> vector<8x16xf32>
    %48 = tpu.reciprocal %44 {approx = true} : vector<8x1xf32> -> vector<8x1xf32>
    %49 = vector.broadcast %48 : vector<8x1xf32> to vector<8x16xf32>
    %50 = arith.mulf %47, %49 : vector<8x16xf32>
    %51 = arith.truncf %50 : vector<8x16xf32> to vector<8x16xbf16>
    %c0_38 = arith.constant 0 : index
    %c0_39 = arith.constant 0 : index
    %c0_40 = arith.constant 0 : index
    %c0_41 = arith.constant 0 : index
    %52 = vector.load %arg7[%c0_38, %c0_39, %c0_40, %c0_41] : memref<1x2x16x32xbf16, #tpu.memory_space<vmem>>, vector<1x1x16x32xbf16>
    %53 = vector.shape_cast %52 : vector<1x1x16x32xbf16> to vector<16x32xbf16>
    %cst_42 = arith.constant dense<0.000000e+00> : vector<8x32xf32>
    %54 = tpu.matmul %51, %53, %cst_42 {dimension_numbers = #tpu.dot_dimension_numbers<[1], [0], [0], [1], [0, 0, 1, 1], [], []>} : vector<8x16xbf16>, vector<16x32xbf16>, vector<8x32xf32> -> vector<8x32xf32>
    %55 = arith.addf %9, %54 : vector<8x32xf32>
    %c0_43 = arith.constant 0 : index
    %c1 = arith.constant 1 : index
    %c0_44 = arith.constant 0 : index
    %c0_45 = arith.constant 0 : index
    %56 = vector.load %arg5[%c0_43, %c1, %c0_44, %c0_45] : memref<1x6x32x16xbf16, #tpu.memory_space<vmem>>, vector<1x1x32x16xbf16>
    %57 = vector.shape_cast %56 : vector<1x1x32x16xbf16> to vector<32x16xbf16>
    %cst_46 = arith.constant dense<0.000000e+00> : vector<8x16xf32>
    %58 = tpu.matmul %4, %57, %cst_46 {dimension_numbers = #tpu.dot_dimension_numbers<[1], [0], [0], [1], [0, 0, 1, 1], [], []>} : vector<8x32xbf16>, vector<32x16xbf16>, vector<8x16xf32> -> vector<8x16xf32>
    %c0_47 = arith.constant 0 : index
    %c1_48 = arith.constant 1 : index
    %c0_49 = arith.constant 0 : index
    %c0_50 = arith.constant 0 : index
    %59 = vector.load %arg6[%c0_47, %c1_48, %c0_49, %c0_50] : memref<1x6x1x16xf32, #tpu.memory_space<vmem>>, vector<1x1x1x16xf32>
    %60 = vector.shape_cast %59 : vector<1x1x1x16xf32> to vector<1x16xf32>
    %61 = vector.broadcast %60 : vector<1x16xf32> to vector<8x16xf32>
    %62 = arith.addf %58, %61 : vector<8x16xf32>
    %c0_51 = arith.constant 0 : index
    %c3 = arith.constant 3 : index
    %c0_52 = arith.constant 0 : index
    %c0_53 = arith.constant 0 : index
    %63 = vector.load %arg5[%c0_51, %c3, %c0_52, %c0_53] : memref<1x6x32x16xbf16, #tpu.memory_space<vmem>>, vector<1x1x32x16xbf16>
    %64 = vector.shape_cast %63 : vector<1x1x32x16xbf16> to vector<32x16xbf16>
    %cst_54 = arith.constant dense<0.000000e+00> : vector<8x16xf32>
    %65 = tpu.matmul %4, %64, %cst_54 {dimension_numbers = #tpu.dot_dimension_numbers<[1], [0], [0], [1], [0, 0, 1, 1], [], []>} : vector<8x32xbf16>, vector<32x16xbf16>, vector<8x16xf32> -> vector<8x16xf32>
    %c0_55 = arith.constant 0 : index
    %c3_56 = arith.constant 3 : index
    %c0_57 = arith.constant 0 : index
    %c0_58 = arith.constant 0 : index
    %66 = vector.load %arg6[%c0_55, %c3_56, %c0_57, %c0_58] : memref<1x6x1x16xf32, #tpu.memory_space<vmem>>, vector<1x1x1x16xf32>
    %67 = vector.shape_cast %66 : vector<1x1x1x16xf32> to vector<1x16xf32>
    %68 = vector.broadcast %67 : vector<1x16xf32> to vector<8x16xf32>
    %69 = arith.addf %65, %68 : vector<8x16xf32>
    %c0_59 = arith.constant 0 : index
    %c5 = arith.constant 5 : index
    %c0_60 = arith.constant 0 : index
    %c0_61 = arith.constant 0 : index
    %70 = vector.load %arg5[%c0_59, %c5, %c0_60, %c0_61] : memref<1x6x32x16xbf16, #tpu.memory_space<vmem>>, vector<1x1x32x16xbf16>
    %71 = vector.shape_cast %70 : vector<1x1x32x16xbf16> to vector<32x16xbf16>
    %cst_62 = arith.constant dense<0.000000e+00> : vector<8x16xf32>
    %72 = tpu.matmul %4, %71, %cst_62 {dimension_numbers = #tpu.dot_dimension_numbers<[1], [0], [0], [1], [0, 0, 1, 1], [], []>} : vector<8x32xbf16>, vector<32x16xbf16>, vector<8x16xf32> -> vector<8x16xf32>
    %c0_63 = arith.constant 0 : index
    %c5_64 = arith.constant 5 : index
    %c0_65 = arith.constant 0 : index
    %c0_66 = arith.constant 0 : index
    %73 = vector.load %arg6[%c0_63, %c5_64, %c0_65, %c0_66] : memref<1x6x1x16xf32, #tpu.memory_space<vmem>>, vector<1x1x1x16xf32>
    %74 = vector.shape_cast %73 : vector<1x1x1x16xf32> to vector<1x16xf32>
    %75 = vector.broadcast %74 : vector<1x16xf32> to vector<8x16xf32>
    %76 = arith.addf %72, %75 : vector<8x16xf32>
    %77 = arith.truncf %62 : vector<8x16xf32> to vector<8x16xbf16>
    %78 = arith.truncf %69 : vector<8x16xf32> to vector<8x16xbf16>
    "tpu.trace_start"() <{level = 10 : i32, message = "qd,kd->qk"}> : () -> ()
    %cst_67 = arith.constant dense<0.000000e+00> : vector<8x8xf32>
    %79 = tpu.matmul %77, %78, %cst_67 {dimension_numbers = #tpu.dot_dimension_numbers<[1], [1], [0], [0], [0, 0, 1, 0], [], []>} : vector<8x16xbf16>, vector<8x16xbf16>, vector<8x8xf32> -> vector<8x8xf32>
    "tpu.trace_stop"() : () -> ()
    %cst_68 = arith.constant 2.500000e-01 : f32
    %80 = vector.broadcast %cst_68 : f32 to vector<8x8xf32>
    %81 = arith.mulf %79, %80 : vector<8x8xf32>
    %82 = vector.broadcast %6 : vector<1x8xf32> to vector<8x8xf32>
    %83 = arith.addf %81, %82 : vector<8x8xf32>
    %cst_69 = arith.constant dense<0xFF800000> : vector<8xf32>
    %84 = vector.multi_reduction <maximumf>, %83, %cst_69 [1] : vector<8x8xf32> to vector<8xf32>
    %85 = vector.shape_cast %84 : vector<8xf32> to vector<8x1xf32>
    %86 = vector.broadcast %85 : vector<8x1xf32> to vector<8x8xf32>
    %87 = arith.subf %83, %86 : vector<8x8xf32>
    %88 = math.exp %87 : vector<8x8xf32>
    %cst_70 = arith.constant dense<0.000000e+00> : vector<8xf32>
    %89 = vector.multi_reduction <add>, %88, %cst_70 [1] : vector<8x8xf32> to vector<8xf32>
    %90 = vector.shape_cast %89 : vector<8xf32> to vector<8x1xf32>
    %91 = arith.truncf %88 : vector<8x8xf32> to vector<8x8xbf16>
    %92 = arith.truncf %76 : vector<8x16xf32> to vector<8x16xbf16>
    %cst_71 = arith.constant dense<0.000000e+00> : vector<8x16xf32>
    %93 = tpu.matmul %91, %92, %cst_71 {dimension_numbers = #tpu.dot_dimension_numbers<[1], [0], [0], [1], [0, 0, 1, 1], [], []>} : vector<8x8xbf16>, vector<8x16xbf16>, vector<8x16xf32> -> vector<8x16xf32>
    %94 = tpu.reciprocal %90 {approx = true} : vector<8x1xf32> -> vector<8x1xf32>
    %95 = vector.broadcast %94 : vector<8x1xf32> to vector<8x16xf32>
    %96 = arith.mulf %93, %95 : vector<8x16xf32>
    %97 = arith.truncf %96 : vector<8x16xf32> to vector<8x16xbf16>
    %c0_72 = arith.constant 0 : index
    %c1_73 = arith.constant 1 : index
    %c0_74 = arith.constant 0 : index
    %c0_75 = arith.constant 0 : index
    %98 = vector.load %arg7[%c0_72, %c1_73, %c0_74, %c0_75] : memref<1x2x16x32xbf16, #tpu.memory_space<vmem>>, vector<1x1x16x32xbf16>
    %99 = vector.shape_cast %98 : vector<1x1x16x32xbf16> to vector<16x32xbf16>
    %cst_76 = arith.constant dense<0.000000e+00> : vector<8x32xf32>
    %100 = tpu.matmul %97, %99, %cst_76 {dimension_numbers = #tpu.dot_dimension_numbers<[1], [0], [0], [1], [0, 0, 1, 1], [], []>} : vector<8x16xbf16>, vector<16x32xbf16>, vector<8x32xf32> -> vector<8x32xf32>
    %101 = arith.addf %55, %100 : vector<8x32xf32>
    %102 = vector.extract_strided_slice %8 {offsets = [0, 0], sizes = [1, 32], strides = [1, 1]} : vector<6x32xf32> to vector<1x32xf32>
    %103 = vector.broadcast %102 : vector<1x32xf32> to vector<8x32xf32>
    %104 = arith.addf %101, %103 : vector<8x32xf32>
    %105 = arith.addf %104, %3 : vector<8x32xf32>
    %106 = vector.extract_strided_slice %8 {offsets = [1, 0], sizes = [1, 32], strides = [1, 1]} : vector<6x32xf32> to vector<1x32xf32>
    %107 = vector.extract_strided_slice %8 {offsets = [2, 0], sizes = [1, 32], strides = [1, 1]} : vector<6x32xf32> to vector<1x32xf32>
    %cst_77 = arith.constant dense<0.000000e+00> : vector<8xf32>
    %108 = vector.multi_reduction <add>, %105, %cst_77 [1] : vector<8x32xf32> to vector<8xf32>
    %109 = vector.shape_cast %108 : vector<8xf32> to vector<8x1xf32>
    %cst_78 = arith.constant 3.200000e+01 : f32
    %110 = vector.broadcast %cst_78 : f32 to vector<8x1xf32>
    %111 = arith.divf %109, %110 : vector<8x1xf32>
    %112 = vector.broadcast %111 : vector<8x1xf32> to vector<8x32xf32>
    %113 = arith.subf %105, %112 : vector<8x32xf32>
    %114 = arith.mulf %113, %113 : vector<8x32xf32>
    %cst_79 = arith.constant dense<0.000000e+00> : vector<8xf32>
    %115 = vector.multi_reduction <add>, %114, %cst_79 [1] : vector<8x32xf32> to vector<8xf32>
    %116 = vector.shape_cast %115 : vector<8xf32> to vector<8x1xf32>
    %cst_80 = arith.constant 3.200000e+01 : f32
    %117 = vector.broadcast %cst_80 : f32 to vector<8x1xf32>
    %118 = arith.divf %116, %117 : vector<8x1xf32>
    %119 = vector.broadcast %111 : vector<8x1xf32> to vector<8x32xf32>
    %120 = arith.subf %105, %119 : vector<8x32xf32>
    %cst_81 = arith.constant 9.99999996E-13 : f32
    %121 = vector.broadcast %cst_81 : f32 to vector<8x1xf32>
    %122 = arith.addf %118, %121 : vector<8x1xf32>
    %123 = math.rsqrt %122 : vector<8x1xf32>
    %124 = vector.broadcast %123 : vector<8x1xf32> to vector<8x32xf32>
    %125 = arith.mulf %120, %124 : vector<8x32xf32>
    %126 = vector.broadcast %106 : vector<1x32xf32> to vector<8x32xf32>
    %127 = arith.mulf %125, %126 : vector<8x32xf32>
    %128 = vector.broadcast %107 : vector<1x32xf32> to vector<8x32xf32>
    %129 = arith.addf %127, %128 : vector<8x32xf32>
    %130 = arith.truncf %129 : vector<8x32xf32> to vector<8x32xbf16>
    %c0_82 = arith.constant 0 : index
    %c0_83 = arith.constant 0 : index
    %c0_84 = arith.constant 0 : index
    %131 = vector.load %arg9[%c0_82, %c0_83, %c0_84] : memref<1x32x64xbf16, #tpu.memory_space<vmem>>, vector<1x32x64xbf16>
    %132 = vector.shape_cast %131 : vector<1x32x64xbf16> to vector<32x64xbf16>
    %cst_85 = arith.constant dense<0.000000e+00> : vector<8x64xf32>
    %133 = tpu.matmul %130, %132, %cst_85 {dimension_numbers = #tpu.dot_dimension_numbers<[1], [0], [0], [1], [0, 0, 1, 1], [], []>} : vector<8x32xbf16>, vector<32x64xbf16>, vector<8x64xf32> -> vector<8x64xf32>
    %c0_86 = arith.constant 0 : index
    %c0_87 = arith.constant 0 : index
    %c0_88 = arith.constant 0 : index
    %134 = vector.load %arg10[%c0_86, %c0_87, %c0_88] : memref<1x1x64xf32, #tpu.memory_space<vmem>>, vector<1x1x64xf32>
    %135 = vector.shape_cast %134 : vector<1x1x64xf32> to vector<1x64xf32>
    %136 = vector.broadcast %135 : vector<1x64xf32> to vector<8x64xf32>
    %137 = arith.addf %133, %136 : vector<8x64xf32>
    %138 = arith.mulf %137, %137 : vector<8x64xf32>
    %139 = arith.mulf %137, %138 : vector<8x64xf32>
    %cst_89 = arith.constant 4.471500e-02 : f32
    %140 = vector.broadcast %cst_89 : f32 to vector<8x64xf32>
    %141 = arith.mulf %140, %139 : vector<8x64xf32>
    %142 = arith.addf %137, %141 : vector<8x64xf32>
    %cst_90 = arith.constant 0.797884583 : f32
    %143 = vector.broadcast %cst_90 : f32 to vector<8x64xf32>
    %144 = arith.mulf %143, %142 : vector<8x64xf32>
    %145 = math.tanh %144 : vector<8x64xf32>
    %cst_91 = arith.constant 1.000000e+00 : f32
    %146 = vector.broadcast %cst_91 : f32 to vector<8x64xf32>
    %147 = arith.addf %146, %145 : vector<8x64xf32>
    %cst_92 = arith.constant 5.000000e-01 : f32
    %148 = vector.broadcast %cst_92 : f32 to vector<8x64xf32>
    %149 = arith.mulf %148, %147 : vector<8x64xf32>
    %150 = arith.mulf %137, %149 : vector<8x64xf32>
    %151 = arith.truncf %150 : vector<8x64xf32> to vector<8x64xbf16>
    %c0_93 = arith.constant 0 : index
    %c0_94 = arith.constant 0 : index
    %c0_95 = arith.constant 0 : index
    %152 = vector.load %arg11[%c0_93, %c0_94, %c0_95] : memref<1x64x32xbf16, #tpu.memory_space<vmem>>, vector<1x64x32xbf16>
    %153 = vector.shape_cast %152 : vector<1x64x32xbf16> to vector<64x32xbf16>
    %cst_96 = arith.constant dense<0.000000e+00> : vector<8x32xf32>
    %154 = tpu.matmul %151, %153, %cst_96 {dimension_numbers = #tpu.dot_dimension_numbers<[1], [0], [0], [1], [0, 0, 1, 1], [], []>} : vector<8x64xbf16>, vector<64x32xbf16>, vector<8x32xf32> -> vector<8x32xf32>
    %155 = vector.extract_strided_slice %8 {offsets = [3, 0], sizes = [1, 32], strides = [1, 1]} : vector<6x32xf32> to vector<1x32xf32>
    %156 = vector.broadcast %155 : vector<1x32xf32> to vector<8x32xf32>
    %157 = arith.addf %154, %156 : vector<8x32xf32>
    %158 = arith.addf %157, %129 : vector<8x32xf32>
    %159 = vector.extract_strided_slice %8 {offsets = [4, 0], sizes = [1, 32], strides = [1, 1]} : vector<6x32xf32> to vector<1x32xf32>
    %160 = vector.extract_strided_slice %8 {offsets = [5, 0], sizes = [1, 32], strides = [1, 1]} : vector<6x32xf32> to vector<1x32xf32>
    %cst_97 = arith.constant dense<0.000000e+00> : vector<8xf32>
    %161 = vector.multi_reduction <add>, %158, %cst_97 [1] : vector<8x32xf32> to vector<8xf32>
    %162 = vector.shape_cast %161 : vector<8xf32> to vector<8x1xf32>
    %cst_98 = arith.constant 3.200000e+01 : f32
    %163 = vector.broadcast %cst_98 : f32 to vector<8x1xf32>
    %164 = arith.divf %162, %163 : vector<8x1xf32>
    %165 = vector.broadcast %164 : vector<8x1xf32> to vector<8x32xf32>
    %166 = arith.subf %158, %165 : vector<8x32xf32>
    %167 = arith.mulf %166, %166 : vector<8x32xf32>
    %cst_99 = arith.constant dense<0.000000e+00> : vector<8xf32>
    %168 = vector.multi_reduction <add>, %167, %cst_99 [1] : vector<8x32xf32> to vector<8xf32>
    %169 = vector.shape_cast %168 : vector<8xf32> to vector<8x1xf32>
    %cst_100 = arith.constant 3.200000e+01 : f32
    %170 = vector.broadcast %cst_100 : f32 to vector<8x1xf32>
    %171 = arith.divf %169, %170 : vector<8x1xf32>
    %172 = vector.broadcast %164 : vector<8x1xf32> to vector<8x32xf32>
    %173 = arith.subf %158, %172 : vector<8x32xf32>
    %cst_101 = arith.constant 9.99999996E-13 : f32
    %174 = vector.broadcast %cst_101 : f32 to vector<8x1xf32>
    %175 = arith.addf %171, %174 : vector<8x1xf32>
    %176 = math.rsqrt %175 : vector<8x1xf32>
    %177 = vector.broadcast %176 : vector<8x1xf32> to vector<8x32xf32>
    %178 = arith.mulf %173, %177 : vector<8x32xf32>
    %179 = vector.broadcast %159 : vector<1x32xf32> to vector<8x32xf32>
    %180 = arith.mulf %178, %179 : vector<8x32xf32>
    %181 = vector.broadcast %160 : vector<1x32xf32> to vector<8x32xf32>
    %182 = arith.addf %180, %181 : vector<8x32xf32>
    %c0_102 = arith.constant 0 : index
    %c0_103 = arith.constant 0 : index
    %183 = vector.load %arg16[%c0_102, %c0_103] : memref<8x32xf32, #tpu.memory_space<vmem>>, vector<8x32xf32>
    tpu.vector_store %arg16[%c0_102, %c0_103], %182 {strides = array<i32>} : memref<8x32xf32, #tpu.memory_space<vmem>>, vector<8x32xf32>,
    %c1_i32 = arith.constant 1 : i32
    %184 = arith.cmpi eq, %arg1, %c1_i32 : i32
    %185 = arith.extui %184 : i1 to i32
    %c0_i32_104 = arith.constant 0 : i32
    %186 = arith.cmpi ne, %185, %c0_i32_104 : i32
    scf.if %186 {
      %187 = vector.extract_strided_slice %182 {offsets = [0, 0], sizes = [1, 32], strides = [1, 1]} : vector<8x32xf32> to vector<1x32xf32>
      %c0_105 = arith.constant 0 : index
      %c0_106 = arith.constant 0 : index
      %188 = vector.load %arg12[%c0_105, %c0_106] : memref<2x32xf32, #tpu.memory_space<vmem>>, vector<1x32xf32>
      %c1_107 = arith.constant 1 : index
      %c0_108 = arith.constant 0 : index
      %189 = vector.load %arg12[%c1_107, %c0_108] : memref<2x32xf32, #tpu.memory_space<vmem>>, vector<1x32xf32>
      %cst_109 = arith.constant dense<0.000000e+00> : vector<1xf32>
      %190 = vector.multi_reduction <add>, %187, %cst_109 [1] : vector<1x32xf32> to vector<1xf32>
      %191 = vector.shape_cast %190 : vector<1xf32> to vector<1x1xf32>
      %cst_110 = arith.constant 3.200000e+01 : f32
      %192 = vector.broadcast %cst_110 : f32 to vector<1x1xf32>
      %193 = arith.divf %191, %192 : vector<1x1xf32>
      %194 = vector.broadcast %193 : vector<1x1xf32> to vector<1x32xf32>
      %195 = arith.subf %187, %194 : vector<1x32xf32>
      %196 = arith.mulf %195, %195 : vector<1x32xf32>
      %cst_111 = arith.constant dense<0.000000e+00> : vector<1xf32>
      %197 = vector.multi_reduction <add>, %196, %cst_111 [1] : vector<1x32xf32> to vector<1xf32>
      %198 = vector.shape_cast %197 : vector<1xf32> to vector<1x1xf32>
      %cst_112 = arith.constant 3.200000e+01 : f32
      %199 = vector.broadcast %cst_112 : f32 to vector<1x1xf32>
      %200 = arith.divf %198, %199 : vector<1x1xf32>
      %201 = vector.broadcast %193 : vector<1x1xf32> to vector<1x32xf32>
      %202 = arith.subf %187, %201 : vector<1x32xf32>
      %cst_113 = arith.constant 9.99999974E-6 : f32
      %203 = vector.broadcast %cst_113 : f32 to vector<1x1xf32>
      %204 = arith.addf %200, %203 : vector<1x1xf32>
      %205 = math.rsqrt %204 : vector<1x1xf32>
      %206 = vector.broadcast %205 : vector<1x1xf32> to vector<1x32xf32>
      %207 = arith.mulf %202, %206 : vector<1x32xf32>
      %208 = arith.mulf %207, %188 : vector<1x32xf32>
      %209 = arith.addf %208, %189 : vector<1x32xf32>
      %210 = arith.truncf %209 : vector<1x32xf32> to vector<1x32xbf16>
      %c0_114 = arith.constant 0 : index
      %c0_115 = arith.constant 0 : index
      %211 = vector.load %arg13[%c0_114, %c0_115] : memref<32x32xbf16, #tpu.memory_space<vmem>>, vector<32x32xbf16>
      %cst_116 = arith.constant dense<0.000000e+00> : vector<1x32xf32>
      %212 = tpu.matmul %210, %211, %cst_116 {dimension_numbers = #tpu.dot_dimension_numbers<[1], [0], [0], [1], [0, 0, 1, 1], [], []>} : vector<1x32xbf16>, vector<32x32xbf16>, vector<1x32xf32> -> vector<1x32xf32>
      %c0_117 = arith.constant 0 : index
      %c0_118 = arith.constant 0 : index
      %213 = vector.load %arg14[%c0_117, %c0_118] : memref<1x32xf32, #tpu.memory_space<vmem>>, vector<1x32xf32>
      %214 = arith.addf %212, %213 : vector<1x32xf32>
      %215 = arith.addf %214, %187 : vector<1x32xf32>
      %c0_119 = arith.constant 0 : index
      %c0_120 = arith.constant 0 : index
      %c0_121 = arith.constant 0 : index
      %216 = vector.load %arg15[%c0_119, %c0_120, %c0_121] : memref<1x1x32xf32, #tpu.memory_space<vmem>>, vector<1x1x32xf32>
      %217 = vector.shape_cast %216 : vector<1x1x32xf32> to vector<1x32xf32>
      %218 = vector.shape_cast %215 : vector<1x32xf32> to vector<1x1x32xf32>
      tpu.vector_store %arg15[%c0_119, %c0_120, %c0_121], %218 {strides = array<i32>} : memref<1x1x32xf32, #tpu.memory_space<vmem>>, vector<1x1x32xf32>,
    } else {
    }
    return
  }
  func.func @transform_0(%arg0: i32, %arg1: i32) -> (i32, i32, i32) {
    %c0_i32 = arith.constant 0 : i32
    %c0_i32_0 = arith.constant 0 : i32
    %c0_i32_1 = arith.constant 0 : i32
    return %arg0, %c0_i32, %c0_i32_0 : i32, i32, i32
  }
  func.func @transform_1(%arg0: i32, %arg1: i32) -> (i32, i32, i32) {
    %c0_i32 = arith.constant 0 : i32
    %c0_i32_0 = arith.constant 0 : i32
    %c0_i32_1 = arith.constant 0 : i32
    return %arg0, %c0_i32, %c0_i32_0 : i32, i32, i32
  }
  func.func @transform_2(%arg0: i32, %arg1: i32) -> (i32, i32) {
    %c0_i32 = arith.constant 0 : i32
    %c0_i32_0 = arith.constant 0 : i32
    %c0_i32_1 = arith.constant 0 : i32
    return %c0_i32, %c0_i32_0 : i32, i32
  }
  func.func @transform_3(%arg0: i32, %arg1: i32) -> (i32, i32, i32, i32) {
    %c0_i32 = arith.constant 0 : i32
    %c0_i32_0 = arith.constant 0 : i32
    %c0_i32_1 = arith.constant 0 : i32
    %c0_i32_2 = arith.constant 0 : i32
    return %arg1, %c0_i32, %c0_i32_0, %c0_i32_1 : i32, i32, i32, i32
  }
  func.func @transform_4(%arg0: i32, %arg1: i32) -> (i32, i32, i32, i32) {
    %c0_i32 = arith.constant 0 : i32
    %c0_i32_0 = arith.constant 0 : i32
    %c0_i32_1 = arith.constant 0 : i32
    %c0_i32_2 = arith.constant 0 : i32
    return %arg1, %c0_i32, %c0_i32_0, %c0_i32_1 : i32, i32, i32, i32
  }
  func.func @transform_5(%arg0: i32, %arg1: i32) -> (i32, i32, i32, i32) {
    %c0_i32 = arith.constant 0 : i32
    %c0_i32_0 = arith.constant 0 : i32
    %c0_i32_1 = arith.constant 0 : i32
    %c0_i32_2 = arith.constant 0 : i32
    return %arg1, %c0_i32, %c0_i32_0, %c0_i32_1 : i32, i32, i32, i32
  }
  func.func @transform_6(%arg0: i32, %arg1: i32) -> (i32, i32, i32) {
    %c0_i32 = arith.constant 0 : i32
    %c0_i32_0 = arith.constant 0 : i32
    %c0_i32_1 = arith.constant 0 : i32
    return %arg1, %c0_i32, %c0_i32_0 : i32, i32, i32
  }
  func.func @transform_7(%arg0: i32, %arg1: i32) -> (i32, i32, i32) {
    %c0_i32 = arith.constant 0 : i32
    %c0_i32_0 = arith.constant 0 : i32
    %c0_i32_1 = arith.constant 0 : i32
    return %arg1, %c0_i32, %c0_i32_0 : i32, i32, i32
  }
  func.func @transform_8(%arg0: i32, %arg1: i32) -> (i32, i32, i32) {
    %c0_i32 = arith.constant 0 : i32
    %c0_i32_0 = arith.constant 0 : i32
    %c0_i32_1 = arith.constant 0 : i32
    return %arg1, %c0_i32, %c0_i32_0 : i32, i32, i32
  }
  func.func @transform_9(%arg0: i32, %arg1: i32) -> (i32, i32, i32) {
    %c0_i32 = arith.constant 0 : i32
    %c0_i32_0 = arith.constant 0 : i32
    %c0_i32_1 = arith.constant 0 : i32
    return %arg1, %c0_i32, %c0_i32_0 : i32, i32, i32
  }
  func.func @transform_10(%arg0: i32, %arg1: i32) -> (i32, i32) {
    %c0_i32 = arith.constant 0 : i32
    %c0_i32_0 = arith.constant 0 : i32
    %c0_i32_1 = arith.constant 0 : i32
    return %c0_i32, %c0_i32_0 : i32, i32
  }
  func.func @transform_11(%arg0: i32, %arg1: i32) -> (i32, i32) {
    %c0_i32 = arith.constant 0 : i32
    %c0_i32_0 = arith.constant 0 : i32
    %c0_i32_1 = arith.constant 0 : i32
    return %c0_i32, %c0_i32_0 : i32, i32
  }
  func.func @transform_12(%arg0: i32, %arg1: i32) -> (i32, i32) {
    %c0_i32 = arith.constant 0 : i32
    %c0_i32_0 = arith.constant 0 : i32
    %c0_i32_1 = arith.constant 0 : i32
    return %c0_i32, %c0_i32_0 : i32, i32
  }
  func.func @transform_13(%arg0: i32, %arg1: i32) -> (i32, i32, i32) {
    %c0_i32 = arith.constant 0 : i32
    %c0_i32_0 = arith.constant 0 : i32
    %c0_i32_1 = arith.constant 0 : i32
    return %arg0, %c0_i32, %c0_i32_0 : i32, i32, i32
  }
}

</mosaic_0001>

<llo_original>
// kernel: forward.1
$region0: #{forward.1}
  #allocation0 [shape = 'u32[]', space=smem, size = 0x4, offset = 0x4, fixed_abs, tag = 'smem constant byte address 0x4 - core index']
  #allocation1 [shape = 'u32[144,128]{1,0:T(1,128)}', space=vmem, size = 0x12000, scoped, tag = 'internal scratch']
  #allocation2 [shape = 'f32[8,32]{1,0:T(8,128)}', space=vmem, size = 0x1000, scoped, tag = 'scratch operand']
  %s0 = inlined_call_operand.vmem [shape: f32[2,8,32], index: 0, kind: input, shape index: {}]
  %s1 = inlined_call_operand.vmem [shape: f32[2,1,8], index: 1, kind: input, shape index: {}]
  %s2 = inlined_call_operand.vmem [shape: f32[2,32], index: 2, kind: input, shape index: {}, may-alias: {2,10}]
  %s3 = inlined_call_operand.vmem [shape: bf16[2,6,32,16], index: 3, kind: input, shape index: {}]
  %s4 = inlined_call_operand.vmem [shape: f32[2,6,1,16], index: 4, kind: input, shape index: {}]
  %s5 = inlined_call_operand.vmem [shape: bf16[2,2,16,32], index: 5, kind: input, shape index: {}]
  %s6 = inlined_call_operand.hbm [shape: f32[2,6,32], index: 6, kind: input, shape index: {}]
  %s7 = inlined_call_operand.hbm [shape: bf16[2,32,64], index: 7, kind: input, shape index: {}]
  %s8 = inlined_call_operand.vmem [shape: f32[2,1,64], index: 8, kind: input, shape index: {}]
  %s9 = inlined_call_operand.hbm [shape: bf16[2,64,32], index: 9, kind: input, shape index: {}]
  %s10 = inlined_call_operand.vmem [shape: f32[2,32], index: 10, kind: input, shape index: {}, may-alias: {2,10}]
  %s11 = inlined_call_operand.hbm [shape: bf16[32,32], index: 11, kind: input, shape index: {}]
  %s12 = inlined_call_operand.vmem [shape: f32[1,32], index: 12, kind: input, shape index: {}]
  %s13 = inlined_call_operand.hbm [shape: f32[2,1,32], index: 13, kind: output, shape index: {}]
  %s14 = sld [smem:[#allocation0]]
  $region109: #{forward.1} parent=0
    _
  %s16 = ssub.s32 1, %s14
  %s17 = scalar_select 0, %s16, %s14
  $region1: #{forward.1} parent=0
    #allocation3 [shape = 'u8[8192]{0}', space=vmem, size = 0x2000, scoped, tag = 'input window, operand 6']
    #allocation4 [shape = 's32[2]{0}', space=sflag, size = 0x8, scoped, tag = 'scoped memory for forward.1']
    #allocation5 [shape = 's32[2]{0}', space=sflag, size = 0x8, scoped, tag = 'scoped memory for forward.1']
    #allocation6 [shape = 'u8[16384]{0}', space=vmem, size = 0x4000, scoped, tag = 'input window, operand 7']
    #allocation7 [shape = 's32[2]{0}', space=sflag, size = 0x8, scoped, tag = 'scoped memory for forward.1']
    #allocation8 [shape = 'u8[32768]{0}', space=vmem, size = 0x8000, scoped, tag = 'input window, operand 9']
    #allocation9 [shape = 'u8[8192]{0}', space=vmem, size = 0x2000, scoped, tag = 'input window, operand 11, single buffered']
    #allocation10 [shape = 's32[1]{0}', space=sflag, size = 0x4, scoped, tag = 'scoped memory for forward.1']
    #allocation11 [shape = 'u8[1024]{0}', space=vmem, size = 0x400, scoped, tag = 'output window, operand 0']
    %18 = vsyncpa [#allocation4], 0
    %s19 = scalar_lea.sflag [#allocation4], 1
    %20 = vsyncpa %s19, 0
    %21 = vsyncpa [#allocation7], 0
    %s22 = scalar_lea.sflag [#allocation7], 1
    %23 = vsyncpa %s22, 0
    %24 = vsyncpa [#allocation10], 0
    %25 = vsyncpa [#allocation5], 0
    %s26 = scalar_lea.sflag [#allocation5], 1
    %27 = vsyncpa %s26, 0
    loop: start=0, step=1, limit=6
    $region2: #{forward.1} parent=1 // loop_pre_header
      _
    $region3: #{forward.1} parent=1 // loop_header
      %s29 = sphi 0, %s33
      %p30 = scmp.ge.s32.totalorder %s29, 6
      %s36 = sphi 0, %s48
      %s37 = sphi 0, %s44
      %s38 = sphi 0, %s36
      %s39 = sphi 0, %s37
      %s40 = sphi 0, %s38
      %s41 = sphi 0, %s39
      %s51 = sphi 0, %s53
      %s54 = sphi 0, %s51
      %s55 = sphi 0, %s54
      %s71 = sphi 0, %s55
      %s77 = sphi 0, %s79
      %s80 = sphi 0, %s77
      %s81 = sphi 0, %s80
      %s97 = sphi 0, %s81
      %s101 = sphi 0, %s101
      %s103 = sphi 0, %s101
      %s104 = sphi 0, %s103
      %s118 = sphi 0, %s104
      %s124 = sphi 0, %s126
      %s127 = sphi 0, %s124
      %s128 = sphi 0, %s127
      %s144 = sphi 0, %s128
      %s150 = sphi 0, %s152
      %s153 = sphi 0, %s150
      %s154 = sphi 0, %s153
      %s170 = sphi 0, %s154
      %s176 = sphi 0, %s178
      %s179 = sphi 0, %s176
      %s180 = sphi 0, %s179
      %s196 = sphi 0, %s180
      %s202 = sphi 0, %s204
      %s205 = sphi 0, %s202
      %s206 = sphi 0, %s205
      %s222 = sphi 0, %s206
      %s228 = sphi 0, %s230
      %s231 = sphi 0, %s228
      %s232 = sphi 0, %s231
      %s248 = sphi 0, %s232
      %s254 = sphi 0, %s256
      %s257 = sphi 0, %s254
      %s258 = sphi 0, %s257
      %s274 = sphi 0, %s258
      %s280 = sphi 0, %s282
      %s283 = sphi 0, %s280
      %s284 = sphi 0, %s283
      %s300 = sphi 0, %s284
      %s304 = sphi 0, %s304
      %s306 = sphi 0, %s304
      %s307 = sphi 0, %s306
      %s321 = sphi 0, %s307
      %s325 = sphi 0, %s325
      %s327 = sphi 0, %s325
      %s328 = sphi 0, %s327
      %s342 = sphi 0, %s328
      %s346 = sphi 0, %s346
      %s348 = sphi 0, %s346
      %s349 = sphi 0, %s348
      %s363 = sphi 0, %s349
      %s369 = sphi 0, %s371
      %s372 = sphi 0, %s369
      %s373 = sphi 0, %s372
      %s389 = sphi 0, %s373
    $region4: #{forward.1} parent=1 // loop_header_branch
      %32 = sbr.rel (%p30) target = $region8
    $region5: #{forward.1} parent=1 // loop_body
      %s34 = ssub.s32 %s29, 1
      %s35 = ssub.s32 %s29, 2
      %s42 = sadd.s32 1, %s37
      %p43 = scmp.ge.s32.totalorder %s42, 2
      %s44 = scalar_select %p43, 0, %s42
      %s45 = sadd.s32 1, %s36
      %s46 = scalar_select %p43, %s45, %s36
      %p47 = scmp.ge.s32.totalorder %s46, 2
      %s48 = scalar_select %p47, 0, %s46
      %s49 = ssub.s32 %s36, %s48
      %p50 = scmp.eq.s32.totalorder %s49, 0
      %s52 = sadd.s32 %s51, 1
      %s53 = scalar_select %p50, %s51, %s52
      %p56 = pneg %p50
      %p57 = scmp.eq.s32.totalorder %s29, 3
      %p58 = por %p56, %p57
      %p59 = scmp.ne.s32.totalorder %s51, %s54
      %p60 = scmp.eq.s32.totalorder %s29, 0
      %p61 = por %p59, %p60
      %p62 = scmp.ne.s32.totalorder %s51, %s54
      %p63 = scmp.eq.s32.totalorder %s34, 3
      %p64 = por %p62, %p63
      %p65 = scmp.ne.s32.totalorder %s54, %s55
      %p66 = scmp.eq.s32.totalorder %s34, 0
      %p67 = por %p65, %p66
      %p68 = scmp.ne.s32.totalorder %s54, %s55
      %p69 = scmp.eq.s32.totalorder %s35, 3
      %p70 = por %p68, %p69
      %p72 = scmp.ne.s32.totalorder %s55, %s71
      %p73 = scmp.eq.s32.totalorder %s35, 0
      %p74 = por %p72, %p73
      %s75 = ssub.s32 %s36, %s48
      %p76 = scmp.eq.s32.totalorder %s75, 0
      %s78 = sadd.s32 %s77, 1
      %s79 = scalar_select %p76, %s77, %s78
      %p82 = pneg %p76
      %p83 = scmp.eq.s32.totalorder %s29, 3
      %p84 = por %p82, %p83
      %p85 = scmp.ne.s32.totalorder %s77, %s80
      %p86 = scmp.eq.s32.totalorder %s29, 0
      %p87 = por %p85, %p86
      %p88 = scmp.ne.s32.totalorder %s77, %s80
      %p89 = scmp.eq.s32.totalorder %s34, 3
      %p90 = por %p88, %p89
      %p91 = scmp.ne.s32.totalorder %s80, %s81
      %p92 = scmp.eq.s32.totalorder %s34, 0
      %p93 = por %p91, %p92
      %p94 = scmp.ne.s32.totalorder %s80, %s81
      %p95 = scmp.eq.s32.totalorder %s35, 3
      %p96 = por %p94, %p95
      %p98 = scmp.ne.s32.totalorder %s81, %s97
      %p99 = scmp.eq.s32.totalorder %s35, 0
      %p100 = por %p98, %p99
      %s102 = sadd.s32 %s101, 1
      %p105 = scmp.eq.s32.totalorder %s29, 3
      %p106 = scmp.ne.s32.totalorder %s101, %s103
      %p107 = scmp.eq.s32.totalorder %s29, 0
      %p108 = por %p106, %p107
      %p109 = scmp.ne.s32.totalorder %s101, %s103
      %p110 = scmp.eq.s32.totalorder %s34, 3
      %p111 = por %p109, %p110
      %p112 = scmp.ne.s32.totalorder %s103, %s104
      %p113 = scmp.eq.s32.totalorder %s34, 0
      %p114 = por %p112, %p113
      %p115 = scmp.ne.s32.totalorder %s103, %s104
      %p116 = scmp.eq.s32.totalorder %s35, 3
      %p117 = por %p115, %p116
      %p119 = scmp.ne.s32.totalorder %s104, %s118
      %p120 = scmp.eq.s32.totalorder %s35, 0
      %p121 = por %p119, %p120
      %s122 = ssub.s32 %s37, %s44
      %p123 = scmp.eq.s32.totalorder %s122, 0
      %s125 = sadd.s32 %s124, 1
      %s126 = scalar_select %p123, %s124, %s125
      %p129 = pneg %p123
      %p130 = scmp.eq.s32.totalorder %s29, 3
      %p131 = por %p129, %p130
      %p132 = scmp.ne.s32.totalorder %s124, %s127
      %p133 = scmp.eq.s32.totalorder %s29, 0
      %p134 = por %p132, %p133
      %p135 = scmp.ne.s32.totalorder %s124, %s127
      %p136 = scmp.eq.s32.totalorder %s34, 3
      %p137 = por %p135, %p136
      %p138 = scmp.ne.s32.totalorder %s127, %s128
      %p139 = scmp.eq.s32.totalorder %s34, 0
      %p140 = por %p138, %p139
      %p141 = scmp.ne.s32.totalorder %s127, %s128
      %p142 = scmp.eq.s32.totalorder %s35, 3
      %p143 = por %p141, %p142
      %p145 = scmp.ne.s32.totalorder %s128, %s144
      %p146 = scmp.eq.s32.totalorder %s35, 0
      %p147 = por %p145, %p146
      %s148 = ssub.s32 %s37, %s44
      %p149 = scmp.eq.s32.totalorder %s148, 0
      %s151 = sadd.s32 %s150, 1
      %s152 = scalar_select %p149, %s150, %s151
      %p155 = pneg %p149
      %p156 = scmp.eq.s32.totalorder %s29, 3
      %p157 = por %p155, %p156
      %p158 = scmp.ne.s32.totalorder %s150, %s153
      %p159 = scmp.eq.s32.totalorder %s29, 0
      %p160 = por %p158, %p159
      %p161 = scmp.ne.s32.totalorder %s150, %s153
      %p162 = scmp.eq.s32.totalorder %s34, 3
      %p163 = por %p161, %p162
      %p164 = scmp.ne.s32.totalorder %s153, %s154
      %p165 = scmp.eq.s32.totalorder %s34, 0
      %p166 = por %p164, %p165
      %p167 = scmp.ne.s32.totalorder %s153, %s154
      %p168 = scmp.eq.s32.totalorder %s35, 3
      %p169 = por %p167, %p168
      %p171 = scmp.ne.s32.totalorder %s154, %s170
      %p172 = scmp.eq.s32.totalorder %s35, 0
      %p173 = por %p171, %p172
      %s174 = ssub.s32 %s37, %s44
      %p175 = scmp.eq.s32.totalorder %s174, 0
      %s177 = sadd.s32 %s176, 1
      %s178 = scalar_select %p175, %s176, %s177
      %p181 = pneg %p175
      %p182 = scmp.eq.s32.totalorder %s29, 3
      %p183 = por %p181, %p182
      %p184 = scmp.ne.s32.totalorder %s176, %s179
      %p185 = scmp.eq.s32.totalorder %s29, 0
      %p186 = por %p184, %p185
      %p187 = scmp.ne.s32.totalorder %s176, %s179
      %p188 = scmp.eq.s32.totalorder %s34, 3
      %p189 = por %p187, %p188
      %p190 = scmp.ne.s32.totalorder %s179, %s180
      %p191 = scmp.eq.s32.totalorder %s34, 0
      %p192 = por %p190, %p191
      %p193 = scmp.ne.s32.totalorder %s179, %s180
      %p194 = scmp.eq.s32.totalorder %s35, 3
      %p195 = por %p193, %p194
      %p197 = scmp.ne.s32.totalorder %s180, %s196
      %p198 = scmp.eq.s32.totalorder %s35, 0
      %p199 = por %p197, %p198
      %s200 = ssub.s32 %s37, %s44
      %p201 = scmp.eq.s32.totalorder %s200, 0
      %s203 = sadd.s32 %s202, 1
      %s204 = scalar_select %p201, %s202, %s203
      %p207 = pneg %p201
      %p208 = scmp.eq.s32.totalorder %s29, 3
      %p209 = por %p207, %p208
      %p210 = scmp.ne.s32.totalorder %s202, %s205
      %p211 = scmp.eq.s32.totalorder %s29, 0
      %p212 = por %p210, %p211
      %p213 = scmp.ne.s32.totalorder %s202, %s205
      %p214 = scmp.eq.s32.totalorder %s34, 3
      %p215 = por %p213, %p214
      %p216 = scmp.ne.s32.totalorder %s205, %s206
      %p217 = scmp.eq.s32.totalorder %s34, 0
      %p218 = por %p216, %p217
      %p219 = scmp.ne.s32.totalorder %s205, %s206
      %p220 = scmp.eq.s32.totalorder %s35, 3
      %p221 = por %p219, %p220
      %p223 = scmp.ne.s32.totalorder %s206, %s222
      %p224 = scmp.eq.s32.totalorder %s35, 0
      %p225 = por %p223, %p224
      %s226 = ssub.s32 %s37, %s44
      %p227 = scmp.eq.s32.totalorder %s226, 0
      %s229 = sadd.s32 %s228, 1
      %s230 = scalar_select %p227, %s228, %s229
      %p233 = pneg %p227
      %p234 = scmp.eq.s32.totalorder %s29, 3
      %p235 = por %p233, %p234
      %p236 = scmp.ne.s32.totalorder %s228, %s231
      %p237 = scmp.eq.s32.totalorder %s29, 0
      %p238 = por %p236, %p237
      %p239 = scmp.ne.s32.totalorder %s228, %s231
      %p240 = scmp.eq.s32.totalorder %s34, 3
      %p241 = por %p239, %p240
      %p242 = scmp.ne.s32.totalorder %s231, %s232
      %p243 = scmp.eq.s32.totalorder %s34, 0
      %p244 = por %p242, %p243
      %p245 = scmp.ne.s32.totalorder %s231, %s232
      %p246 = scmp.eq.s32.totalorder %s35, 3
      %p247 = por %p245, %p246
      %p249 = scmp.ne.s32.totalorder %s232, %s248
      %p250 = scmp.eq.s32.totalorder %s35, 0
      %p251 = por %p249, %p250
      %s252 = ssub.s32 %s37, %s44
      %p253 = scmp.eq.s32.totalorder %s252, 0
      %s255 = sadd.s32 %s254, 1
      %s256 = scalar_select %p253, %s254, %s255
      %p259 = pneg %p253
      %p260 = scmp.eq.s32.totalorder %s29, 3
      %p261 = por %p259, %p260
      %p262 = scmp.ne.s32.totalorder %s254, %s257
      %p263 = scmp.eq.s32.totalorder %s29, 0
      %p264 = por %p262, %p263
      %p265 = scmp.ne.s32.totalorder %s254, %s257
      %p266 = scmp.eq.s32.totalorder %s34, 3
      %p267 = por %p265, %p266
      %p268 = scmp.ne.s32.totalorder %s257, %s258
      %p269 = scmp.eq.s32.totalorder %s34, 0
      %p270 = por %p268, %p269
      %p271 = scmp.ne.s32.totalorder %s257, %s258
      %p272 = scmp.eq.s32.totalorder %s35, 3
      %p273 = por %p271, %p272
      %p275 = scmp.ne.s32.totalorder %s258, %s274
      %p276 = scmp.eq.s32.totalorder %s35, 0
      %p277 = por %p275, %p276
      %s278 = ssub.s32 %s37, %s44
      %p279 = scmp.eq.s32.totalorder %s278, 0
      %s281 = sadd.s32 %s280, 1
      %s282 = scalar_select %p279, %s280, %s281
      %p285 = pneg %p279
      %p286 = scmp.eq.s32.totalorder %s29, 3
      %p287 = por %p285, %p286
      %p288 = scmp.ne.s32.totalorder %s280, %s283
      %p289 = scmp.eq.s32.totalorder %s29, 0
      %p290 = por %p288, %p289
      %p291 = scmp.ne.s32.totalorder %s280, %s283
      %p292 = scmp.eq.s32.totalorder %s34, 3
      %p293 = por %p291, %p292
      %p294 = scmp.ne.s32.totalorder %s283, %s284
      %p295 = scmp.eq.s32.totalorder %s34, 0
      %p296 = por %p294, %p295
      %p297 = scmp.ne.s32.totalorder %s283, %s284
      %p298 = scmp.eq.s32.totalorder %s35, 3
      %p299 = por %p297, %p298
      %p301 = scmp.ne.s32.totalorder %s284, %s300
      %p302 = scmp.eq.s32.totalorder %s35, 0
      %p303 = por %p301, %p302
      %s305 = sadd.s32 %s304, 1
      %p308 = scmp.eq.s32.totalorder %s29, 3
      %p309 = scmp.ne.s32.totalorder %s304, %s306
      %p310 = scmp.eq.s32.totalorder %s29, 0
      %p311 = por %p309, %p310
      %p312 = scmp.ne.s32.totalorder %s304, %s306
      %p313 = scmp.eq.s32.totalorder %s34, 3
      %p314 = por %p312, %p313
      %p315 = scmp.ne.s32.totalorder %s306, %s307
      %p316 = scmp.eq.s32.totalorder %s34, 0
      %p317 = por %p315, %p316
      %p318 = scmp.ne.s32.totalorder %s306, %s307
      %p319 = scmp.eq.s32.totalorder %s35, 3
      %p320 = por %p318, %p319
      %p322 = scmp.ne.s32.totalorder %s307, %s321
      %p323 = scmp.eq.s32.totalorder %s35, 0
      %p324 = por %p322, %p323
      %s326 = sadd.s32 %s325, 1
      %p329 = scmp.eq.s32.totalorder %s29, 3
      %p330 = scmp.ne.s32.totalorder %s325, %s327
      %p331 = scmp.eq.s32.totalorder %s29, 0
      %p332 = por %p330, %p331
      %p333 = scmp.ne.s32.totalorder %s325, %s327
      %p334 = scmp.eq.s32.totalorder %s34, 3
      %p335 = por %p333, %p334
      %p336 = scmp.ne.s32.totalorder %s327, %s328
      %p337 = scmp.eq.s32.totalorder %s34, 0
      %p338 = por %p336, %p337
      %p339 = scmp.ne.s32.totalorder %s327, %s328
      %p340 = scmp.eq.s32.totalorder %s35, 3
      %p341 = por %p339, %p340
      %p343 = scmp.ne.s32.totalorder %s328, %s342
      %p344 = scmp.eq.s32.totalorder %s35, 0
      %p345 = por %p343, %p344
      %s347 = sadd.s32 %s346, 1
      %p350 = scmp.eq.s32.totalorder %s29, 3
      %p351 = scmp.ne.s32.totalorder %s346, %s348
      %p352 = scmp.eq.s32.totalorder %s29, 0
      %p353 = por %p351, %p352
      %p354 = scmp.ne.s32.totalorder %s346, %s348
      %p355 = scmp.eq.s32.totalorder %s34, 3
      %p356 = por %p354, %p355
      %p357 = scmp.ne.s32.totalorder %s348, %s349
      %p358 = scmp.eq.s32.totalorder %s34, 0
      %p359 = por %p357, %p358
      %p360 = scmp.ne.s32.totalorder %s348, %s349
      %p361 = scmp.eq.s32.totalorder %s35, 3
      %p362 = por %p360, %p361
      %p364 = scmp.ne.s32.totalorder %s349, %s363
      %p365 = scmp.eq.s32.totalorder %s35, 0
      %p366 = por %p364, %p365
      %s367 = ssub.s32 %s36, %s48
      %p368 = scmp.eq.s32.totalorder %s367, 0
      %s370 = sadd.s32 %s369, 1
      %s371 = scalar_select %p368, %s369, %s370
      %p374 = pneg %p368
      %p375 = scmp.eq.s32.totalorder %s29, 3
      %p376 = por %p374, %p375
      %p377 = scmp.ne.s32.totalorder %s369, %s372
      %p378 = scmp.eq.s32.totalorder %s29, 0
      %p379 = por %p377, %p378
      %p380 = scmp.ne.s32.totalorder %s369, %s372
      %p381 = scmp.eq.s32.totalorder %s34, 3
      %p382 = por %p380, %p381
      %p383 = scmp.ne.s32.totalorder %s372, %s373
      %p384 = scmp.eq.s32.totalorder %s34, 0
      %p385 = por %p383, %p384
      %p386 = scmp.ne.s32.totalorder %s372, %s373
      %p387 = scmp.eq.s32.totalorder %s35, 3
      %p388 = por %p386, %p387
      %p390 = scmp.ne.s32.totalorder %s373, %s389
      %p391 = scmp.eq.s32.totalorder %s35, 0
      %p392 = por %p390, %p391
      %p393 = scmp.le.s32.totalorder 1, %s29
      %p394 = scmp.lt.s32.totalorder %s29, 5
      %p395 = pnand %p393, %p394
      %p396 = pneg %p395
      // Predicated region
      $region9: #{forward.1} parent=5 // pred_check
        _
      $region10: #{forward.1} parent=5 // pred_check_branch
        %398 = sbr.rel (%p395) target = $region12
      $region11: #{forward.1} parent=5 // pred_region
        %s399 = ssub.s32 %s29, 1
        // Predicated region
        $region13: #{forward.1} parent=11 // pred_check
          %p400 = pneg %p114
        $region14: #{forward.1} parent=11 // pred_check_branch
          %402 = sbr.rel (%p400) target = $region16
        $region15: #{forward.1} parent=11 // pred_region
          _
        $region16: #{forward.1} parent=11 // pred_fallthru
          _
        // Predicated region
        $region17: #{forward.1} parent=11 // pred_check
          %p403 = pneg %p317
        $region18: #{forward.1} parent=11 // pred_check_branch
          %405 = sbr.rel (%p403) target = $region20
        $region19: #{forward.1} parent=11 // pred_region
          _
        $region20: #{forward.1} parent=11 // pred_fallthru
          _
        // Predicated region
        $region21: #{forward.1} parent=11 // pred_check
          %p406 = pneg %p338
        $region22: #{forward.1} parent=11 // pred_check_branch
          %408 = sbr.rel (%p406) target = $region24
        $region23: #{forward.1} parent=11 // pred_region
          %s410 = ssub.s32 256, 256
          %411 = vsyncadd [#allocation10], %s410
          %s412 = sshll.u32 [#allocation9], 4
          %s413 = int_to_ptr.vmem [resolvable:$true] %s412
          %418 = dma.hbm_to_vmem [thread:$0]  %s11, 256, %s413, [#allocation10], 64, 64, 4
        $region24: #{forward.1} parent=11 // pred_fallthru
          _
        // Predicated region
        $region25: #{forward.1} parent=11 // pred_check
          %p419 = pneg %p359
        $region26: #{forward.1} parent=11 // pred_check_branch
          %421 = sbr.rel (%p419) target = $region28
        $region27: #{forward.1} parent=11 // pred_region
          _
        $region28: #{forward.1} parent=11 // pred_fallthru
          _
      $region12: #{forward.1} parent=5 // pred_fallthru
        _
      %p422 = scmp.lt.s32.totalorder %s29, 4
      // Predicated region
      $region29: #{forward.1} parent=5 // pred_check
        %p423 = pneg %p422
      $region30: #{forward.1} parent=5 // pred_check_branch
        %425 = sbr.rel (%p423) target = $region32
      $region31: #{forward.1} parent=5 // pred_region
        // Predicated region
        $region33: #{forward.1} parent=31 // pred_check
          %p426 = pneg %p61
        $region34: #{forward.1} parent=31 // pred_check_branch
          %428 = sbr.rel (%p426) target = $region36
        $region35: #{forward.1} parent=31 // pred_region
          %p429 = scmp.lt.s32.totalorder %s36, 1
          %s430 = scalar_select %p429, %s36, 1
          %s431 = smul.addr %s430, 8
          %s432 = scalar_lea.vmem %s0, %s431
        $region36: #{forward.1} parent=31 // pred_fallthru
          _
        // Predicated region
        $region37: #{forward.1} parent=31 // pred_check
          %p433 = pneg %p87
        $region38: #{forward.1} parent=31 // pred_check_branch
          %435 = sbr.rel (%p433) target = $region40
        $region39: #{forward.1} parent=31 // pred_region
          %p436 = scmp.lt.s32.totalorder %s36, 1
          %s437 = scalar_select %p436, %s36, 1
          %s438 = scalar_lea.vmem %s1, %s437
        $region40: #{forward.1} parent=31 // pred_fallthru
          _
        // Predicated region
        $region41: #{forward.1} parent=31 // pred_check
          %p439 = pneg %p134
        $region42: #{forward.1} parent=31 // pred_check_branch
          %441 = sbr.rel (%p439) target = $region44
        $region43: #{forward.1} parent=31 // pred_region
          %p442 = scmp.lt.s32.totalorder %s37, 1
          %s443 = scalar_select %p442, %s37, 1
          %s444 = smul.addr %s443, 24
          %s445 = smul.addr %s444, 4
          %s446 = scalar_lea.vmem %s3, %s445
        $region44: #{forward.1} parent=31 // pred_fallthru
          _
        // Predicated region
        $region45: #{forward.1} parent=31 // pred_check
          %p447 = pneg %p160
        $region46: #{forward.1} parent=31 // pred_check_branch
          %449 = sbr.rel (%p447) target = $region48
        $region47: #{forward.1} parent=31 // pred_region
          %p450 = scmp.lt.s32.totalorder %s37, 1
          %s451 = scalar_select %p450, %s37, 1
          %s452 = smul.addr %s451, 6
          %s453 = scalar_lea.vmem %s4, %s452
        $region48: #{forward.1} parent=31 // pred_fallthru
          _
        // Predicated region
        $region49: #{forward.1} parent=31 // pred_check
          %p454 = pneg %p186
        $region50: #{forward.1} parent=31 // pred_check_branch
          %456 = sbr.rel (%p454) target = $region52
        $region51: #{forward.1} parent=31 // pred_region
          %p457 = scmp.lt.s32.totalorder %s37, 1
          %s458 = scalar_select %p457, %s37, 1
          %s459 = smul.addr %s458, 4
          %s460 = smul.addr %s459, 4
          %s461 = scalar_lea.vmem %s5, %s460
        $region52: #{forward.1} parent=31 // pred_fallthru
          _
        // Predicated region
        $region53: #{forward.1} parent=31 // pred_check
          %p462 = pneg %p212
        $region54: #{forward.1} parent=31 // pred_check_branch
          %464 = sbr.rel (%p462) target = $region56
        $region55: #{forward.1} parent=31 // pred_region
          %s465 = sand.u32 %s202, 1
          %s466 = scalar_lea.sflag [#allocation4], %s465
          %s467 = sand.u32 %s202, 1
          %s468 = smul.addr %s467, 8
          %s469 = scalar_lea.vmem [#allocation3], %s468
          %s471 = ssub.s32 128, 128
          %472 = vsyncadd %s466, %s471
          %s473 = smul.addr %s37, 128
          %s474 = scalar_lea.hbm %s6, %s473
          %s476 = sshll.u32 %s469, 4
          %s477 = int_to_ptr.vmem [resolvable:$true] %s476
          %479 = dma.hbm_to_vmem [thread:$0]  %s474, 128, %s477, %s466
        $region56: #{forward.1} parent=31 // pred_fallthru
          _
        // Predicated region
        $region57: #{forward.1} parent=31 // pred_check
          %p480 = pneg %p238
        $region58: #{forward.1} parent=31 // pred_check_branch
          %482 = sbr.rel (%p480) target = $region60
        $region59: #{forward.1} parent=31 // pred_region
          %s483 = sand.u32 %s29, 1
          %s484 = scalar_lea.sflag [#allocation7], %s483
          %s485 = sand.u32 %s228, 1
          %s486 = smul.addr %s485, 16
          %s487 = scalar_lea.vmem [#allocation6], %s486
          %s489 = ssub.s32 256, 256
          %490 = vsyncadd %s484, %s489
          %s491 = smul.addr %s37, 4
          %s492 = smul.addr %s491, 64
          %s493 = scalar_lea.hbm %s7, %s492
          %s494 = sshll.u32 %s487, 4
          %s495 = int_to_ptr.vmem [resolvable:$true] %s494
          %500 = dma.hbm_to_vmem [thread:$0]  %s493, 256, %s495, %s484, 64, 64, 4
        $region60: #{forward.1} parent=31 // pred_fallthru
          _
        // Predicated region
        $region61: #{forward.1} parent=31 // pred_check
          %p501 = pneg %p264
        $region62: #{forward.1} parent=31 // pred_check_branch
          %503 = sbr.rel (%p501) target = $region64
        $region63: #{forward.1} parent=31 // pred_region
          %p504 = scmp.lt.s32.totalorder %s37, 1
          %s505 = scalar_select %p504, %s37, 1
          %s506 = scalar_lea.vmem %s8, %s505
        $region64: #{forward.1} parent=31 // pred_fallthru
          _
        // Predicated region
        $region65: #{forward.1} parent=31 // pred_check
          %p507 = pneg %p290
        $region66: #{forward.1} parent=31 // pred_check_branch
          %509 = sbr.rel (%p507) target = $region68
        $region67: #{forward.1} parent=31 // pred_region
          %s510 = sand.u32 %s29, 1
          %s511 = scalar_lea.sflag [#allocation7], %s510
          %s512 = sand.u32 %s280, 1
          %s513 = smul.addr %s512, 32
          %s514 = scalar_lea.vmem [#allocation8], %s513
          %s516 = ssub.s32 512, 512
          %517 = vsyncadd %s511, %s516
          %s518 = smul.addr %s37, 8
          %s519 = smul.addr %s518, 64
          %s520 = scalar_lea.hbm %s9, %s519
          %s521 = sshll.u32 %s514, 4
          %s522 = int_to_ptr.vmem [resolvable:$true] %s521
          %527 = dma.hbm_to_vmem [thread:$0]  %s520, 512, %s522, %s511, 64, 64, 4
        $region68: #{forward.1} parent=31 // pred_fallthru
          _
      $region32: #{forward.1} parent=5 // pred_fallthru
        _
      %p528 = scmp.le.s32.totalorder 1, %s29
      %p529 = scmp.lt.s32.totalorder %s29, 5
      %p530 = pnand %p528, %p529
      %p531 = pneg %p530
      // Predicated region
      $region69: #{forward.1} parent=5 // pred_check
        _
      $region70: #{forward.1} parent=5 // pred_check_branch
        %533 = sbr.rel (%p530) target = $region72
      $region71: #{forward.1} parent=5 // pred_region
        %s534 = ssub.s32 %s29, 1
        %s535 = sand.u32 %s205, 1
        %s536 = scalar_lea.sflag [#allocation4], %s535
        %s537 = sand.u32 %s205, 1
        %s538 = smul.addr %s537, 8
        %s539 = scalar_lea.vmem [#allocation3], %s538
        // Predicated region
        $region73: #{forward.1} parent=71 // pred_check
          %p540 = pneg %p218
        $region74: #{forward.1} parent=71 // pred_check_branch
          %542 = sbr.rel (%p540) target = $region76
        $region75: #{forward.1} parent=71 // pred_region
          %543 = dma.done %s536, 128
        $region76: #{forward.1} parent=71 // pred_fallthru
          _
        %s544 = sand.u32 %s34, 1
        %s545 = scalar_lea.sflag [#allocation7], %s544
        %s546 = sand.u32 %s231, 1
        %s547 = smul.addr %s546, 16
        %s548 = scalar_lea.vmem [#allocation6], %s547
        // Predicated region
        $region77: #{forward.1} parent=71 // pred_check
          %p549 = pneg %p244
        $region78: #{forward.1} parent=71 // pred_check_branch
          %551 = sbr.rel (%p549) target = $region80
        $region79: #{forward.1} parent=71 // pred_region
          %552 = dma.done %s545, 256
        $region80: #{forward.1} parent=71 // pred_fallthru
          _
        %s553 = sand.u32 %s34, 1
        %s554 = scalar_lea.sflag [#allocation7], %s553
        %s555 = sand.u32 %s283, 1
        %s556 = smul.addr %s555, 32
        %s557 = scalar_lea.vmem [#allocation8], %s556
        // Predicated region
        $region81: #{forward.1} parent=71 // pred_check
          %p558 = pneg %p296
        $region82: #{forward.1} parent=71 // pred_check_branch
          %560 = sbr.rel (%p558) target = $region84
        $region83: #{forward.1} parent=71 // pred_region
          %561 = dma.done %s554, 512
        $region84: #{forward.1} parent=71 // pred_fallthru
          _
        // Predicated region
        $region85: #{forward.1} parent=71 // pred_check
          %p562 = pneg %p338
        $region86: #{forward.1} parent=71 // pred_check_branch
          %564 = sbr.rel (%p562) target = $region88
        $region87: #{forward.1} parent=71 // pred_region
          %565 = dma.done [#allocation10], 256
        $region88: #{forward.1} parent=71 // pred_fallthru
          _
        %p566 = scmp.lt.s32.totalorder %s38, 1
        %s567 = scalar_select %p566, %s38, 1
        %s568 = smul.addr %s567, 8
        %s569 = scalar_lea.vmem %s0, %s568
        %p570 = pneg %p67
        %p571 = pneg %p64
        %p572 = scmp.lt.s32.totalorder %s38, 1
        %s573 = scalar_select %p572, %s38, 1
        %s574 = scalar_lea.vmem %s1, %s573
        %p575 = pneg %p93
        %p576 = pneg %p90
        %p577 = pneg %p114
        %p578 = pneg %p111
        %p579 = scmp.lt.s32.totalorder %s39, 1
        %s580 = scalar_select %p579, %s39, 1
        %s581 = smul.addr %s580, 24
        %s582 = smul.addr %s581, 4
        %s583 = scalar_lea.vmem %s3, %s582
        %p584 = pneg %p140
        %p585 = pneg %p137
        %p586 = scmp.lt.s32.totalorder %s39, 1
        %s587 = scalar_select %p586, %s39, 1
        %s588 = smul.addr %s587, 6
        %s589 = scalar_lea.vmem %s4, %s588
        %p590 = pneg %p166
        %p591 = pneg %p163
        %p592 = scmp.lt.s32.totalorder %s39, 1
        %s593 = scalar_select %p592, %s39, 1
        %s594 = smul.addr %s593, 4
        %s595 = smul.addr %s594, 4
        %s596 = scalar_lea.vmem %s5, %s595
        %p597 = pneg %p192
        %p598 = pneg %p189
        %s599 = sand.u32 %s205, 1
        %s600 = scalar_lea.sflag [#allocation4], %s599
        %s601 = sand.u32 %s205, 1
        %s602 = smul.addr %s601, 8
        %s603 = scalar_lea.vmem [#allocation3], %s602
        %p604 = pneg %p218
        %p605 = pneg %p215
        %s606 = sand.u32 %s34, 1
        %s607 = scalar_lea.sflag [#allocation7], %s606
        %s608 = sand.u32 %s231, 1
        %s609 = smul.addr %s608, 16
        %s610 = scalar_lea.vmem [#allocation6], %s609
        %p611 = pneg %p244
        %p612 = pneg %p241
        %p613 = scmp.lt.s32.totalorder %s39, 1
        %s614 = scalar_select %p613, %s39, 1
        %s615 = scalar_lea.vmem %s8, %s614
        %p616 = pneg %p270
        %p617 = pneg %p267
        %s618 = sand.u32 %s34, 1
        %s619 = scalar_lea.sflag [#allocation7], %s618
        %s620 = sand.u32 %s283, 1
        %s621 = smul.addr %s620, 32
        %s622 = scalar_lea.vmem [#allocation8], %s621
        %p623 = pneg %p296
        %p624 = pneg %p293
        %p625 = pneg %p317
        %p626 = pneg %p314
        %p627 = pneg %p338
        %p628 = pneg %p335
        %p629 = pneg %p359
        %p630 = pneg %p356
        %p631 = pneg %p385
        %p632 = pneg %p382
        %s633 = sand.u32 %s372, 1
        %s634 = scalar_lea.sflag [#allocation5], %s633
        %s635 = sand.u32 %s372, 1
        %s636 = scalar_lea.vmem [#allocation11], %s635
        %p637 = scmp.lt.s32.totalorder %s38, 1
        %s638 = scalar_select %p637, %s38, 1
        %s639 = smul.addr %s638, 8
        %s640 = scalar_lea.vmem %s0, %s639
        %p641 = scmp.lt.s32.totalorder %s38, 1
        %s642 = scalar_select %p641, %s38, 1
        %s643 = scalar_lea.vmem %s1, %s642
        %p644 = scmp.lt.s32.totalorder %s39, 1
        %s645 = scalar_select %p644, %s39, 1
        %s646 = smul.addr %s645, 24
        %s647 = smul.addr %s646, 4
        %s648 = scalar_lea.vmem %s3, %s647
        %p649 = scmp.lt.s32.totalorder %s39, 1
        %s650 = scalar_select %p649, %s39, 1
        %s651 = smul.addr %s650, 6
        %s652 = scalar_lea.vmem %s4, %s651
        %p653 = scmp.lt.s32.totalorder %s39, 1
        %s654 = scalar_select %p653, %s39, 1
        %s655 = smul.addr %s654, 4
        %s656 = smul.addr %s655, 4
        %s657 = scalar_lea.vmem %s5, %s656
        %p658 = scmp.lt.s32.totalorder %s39, 1
        %s659 = scalar_select %p658, %s39, 1
        %s660 = scalar_lea.vmem %s8, %s659
        %p662 = scmp.eq.s32.totalorder %s39, 0
        // Predicated region
        $region89: #{forward.1} parent=71 // pred_check
          %p663 = pneg %p662
        $region90: #{forward.1} parent=71 // pred_check_branch
          %665 = sbr.rel (%p663) target = $region92
        $region91: #{forward.1} parent=71 // pred_region
          %v666 = vld [vmem:[%s640] sm:$0xff]
          %v667 = vld [vmem:[%s2] sm:$0x1]
          %v668 = vld [vmem:[%s2 + $0x1] sm:$0x1]
          %vm669 = vcmask 261120
          %v670 = vsel %vm669, %v666, 0.0
          %671 = vadd.xlane.f32.xlu0 %v670
          %v672 = vpop.xlane.xlu0 %671
          %v673 = vrcp.pop 32.0
          %v674 = vmul.f32 %v672, %v673
          %v675 = vsub.f32 %v666, %v674
          %v676 = vmul.f32 %v675, %v675
          %v677 = vsel %vm669, %v676, 0.0
          %678 = vadd.xlane.f32.xlu0 %v677
          %v679 = vpop.xlane.xlu0 %678
          %v680 = vmul.f32 %v679, %v673
          %v681 = vadd.f32 %v680, 1e-12
          %v682 = vrsqrt.pop %v681
          %v683 = vmul.f32 %v675, %v682
          %v684 = vlaneseq
          %v685 = vshrl.u32 %v684, 7
          %v686 = vsub.s32 0, %v685
          %v687 = vrot.slane %v667, %v686
          %v688 = vmul.f32 %v683, %v687
          %v689 = vlaneseq
          %v690 = vshrl.u32 %v689, 7
          %v691 = vsub.s32 0, %v690
          %v692 = vrot.slane %v668, %v691
          %v693 = vadd.f32 %v688, %v692
          %694 = vst.msk [vmem:[#allocation2] sm:$0xff] %vm669, %v693
        $region92: #{forward.1} parent=71 // pred_fallthru
          _
        %v695 = vld [vmem:[#allocation2] sm:$0xff]
        %v696 = vpack.c.bf16 %v695, %v695
        %v697 = vld [vmem:[%s643] sm:$0x1]
        %v698 = vld [vmem:[%s539] sm:$0x3f]
        %v699 = vld [vmem:[%s648] sm:$0xf]
        %v700 = vld [vmem:[%s648 + $0x4] sm:$0xf]
        %v701 = vld [vmem:[%s648 + $0x8] sm:$0xf]
        %v702 = vld [vmem:[%s648 + $0xc] sm:$0xf]
        %v703 = vld [vmem:[%s652] sm:$0x1]
        %v705 = vlaneseq
        %v706 = vshrl.u32 %v705, 7
        %v707 = vsub.s32 0, %v706
        %v708 = vrot.slane %v703, %v707
        %v714 = vunpack.c.l.b16 %v699
        %v715 = vunpack.c.l.b16 %v700
        %v716 = vunpack.c.l.b16 %v701
        %v717 = vunpack.c.l.b16 %v702
        %v718 = vpack.c.b16 %v715, %v714
        %v719 = vpack.c.b16 %v717, %v716
        %vm722 = vcmask 261120
        %v724 = vsel %vm722, %v696, 0
        %726 = vmatprep.subr.bf16.mxu0 0
        %727 = vmatpush1.bf16.msra.mxu0 0
        %728 = vmatprep.subr.bf16.mxu0 0
        %729 = vmatpush1.bf16.msra.mxu0 0
        %730 = vmatprep.subr.bf16.mxu0 0
        %731 = vmatpush1.bf16.msra.mxu0 0
        %732 = vmatprep.subr.bf16.mxu0 0
        %733 = vmatpush1.bf16.msra.mxu0 0
        %734 = vmatprep.subr.bf16.mxu0 0
        %735 = vmatpush1.bf16.msra.mxu0 0
        %736 = vmatprep.subr.bf16.mxu0 0
        %737 = vmatpush1.bf16.msra.mxu0 0
        %738 = vmatprep.subr.bf16.mxu0 0
        %739 = vmatpush1.bf16.msra.mxu0 %v719
        %740 = vmatprep.subr.bf16.mxu0 0
        %741 = vmatpush1.bf16.msra.mxu0 %v718
        %742 = vmatprep.subr.bf16.mxu0 0
        %743 = vmatpush2.bf16.msra.mxu0 0
        %744 = vmatprep.subr.bf16.mxu0 0
        %745 = vmatpush2.bf16.msra.mxu0 0
        %746 = vmatprep.subr.bf16.mxu0 0
        %747 = vmatpush2.bf16.msra.mxu0 0
        %748 = vmatprep.subr.bf16.mxu0 0
        %749 = vmatpush2.bf16.msra.mxu0 0
        %750 = vmatprep.subr.bf16.mxu0 0
        %751 = vmatpush2.bf16.msra.mxu0 0
        %752 = vmatprep.subr.bf16.mxu0 0
        %753 = vmatpush2.bf16.msra.mxu0 0
        %754 = vmatprep.subr.bf16.mxu0 0
        %755 = vmatpush2.bf16.msra.mxu0 0
        %756 = vmatprep.subr.bf16.mxu0 0
        %757 = vmatpush2.bf16.msra.mxu0 0
        %758 = vmatprep.mubr.bf16.mxu0 0
        %759 = vmatmul.mubr.bf16.gmra.mxu0 %v724
        %v760 = vpop.f32.mrf.mxu0
        %v761 = vadd.f32 %v708, %v760
        %v762 = vpop.f32.mrf.mxu0
        %v763 = vpop.f32.mrf.mxu0
        %v764 = vpop.f32.mrf.mxu0
        %765 = vdwg.mxu0
        %s766 = scalar_lea.vmem %s648, 32
        %v767 = vld [vmem:[%s766] sm:$0xf]
        %v768 = vld [vmem:[%s766 + $0x4] sm:$0xf]
        %v769 = vld [vmem:[%s766 + $0x8] sm:$0xf]
        %v770 = vld [vmem:[%s766 + $0xc] sm:$0xf]
        %s771 = scalar_lea.vmem %s652, 2
        %v772 = vld [vmem:[%s771] sm:$0x1]
        %v774 = vlaneseq
        %v775 = vshrl.u32 %v774, 7
        %v776 = vsub.s32 0, %v775
        %v777 = vrot.slane %v772, %v776
        %v783 = vunpack.c.l.b16 %v767
        %v784 = vunpack.c.l.b16 %v768
        %v785 = vunpack.c.l.b16 %v769
        %v786 = vunpack.c.l.b16 %v770
        %v787 = vpack.c.b16 %v784, %v783
        %v788 = vpack.c.b16 %v786, %v785
        %791 = vmatprep.subr.bf16.mxu0 0
        %792 = vmatpush1.bf16.msra.mxu0 0
        %793 = vmatprep.subr.bf16.mxu0 0
        %794 = vmatpush1.bf16.msra.mxu0 0
        %795 = vmatprep.subr.bf16.mxu0 0
        %796 = vmatpush1.bf16.msra.mxu0 0
        %797 = vmatprep.subr.bf16.mxu0 0
        %798 = vmatpush1.bf16.msra.mxu0 0
        %799 = vmatprep.subr.bf16.mxu0 0
        %800 = vmatpush1.bf16.msra.mxu0 0
        %801 = vmatprep.subr.bf16.mxu0 0
        %802 = vmatpush1.bf16.msra.mxu0 0
        %803 = vmatprep.subr.bf16.mxu0 0
        %804 = vmatpush1.bf16.msra.mxu0 %v788
        %805 = vmatprep.subr.bf16.mxu0 0
        %806 = vmatpush1.bf16.msra.mxu0 %v787
        %807 = vmatprep.subr.bf16.mxu0 0
        %808 = vmatpush2.bf16.msra.mxu0 0
        %809 = vmatprep.subr.bf16.mxu0 0
        %810 = vmatpush2.bf16.msra.mxu0 0
        %811 = vmatprep.subr.bf16.mxu0 0
        %812 = vmatpush2.bf16.msra.mxu0 0
        %813 = vmatprep.subr.bf16.mxu0 0
        %814 = vmatpush2.bf16.msra.mxu0 0
        %815 = vmatprep.subr.bf16.mxu0 0
        %816 = vmatpush2.bf16.msra.mxu0 0
        %817 = vmatprep.subr.bf16.mxu0 0
        %818 = vmatpush2.bf16.msra.mxu0 0
        %819 = vmatprep.subr.bf16.mxu0 0
        %820 = vmatpush2.bf16.msra.mxu0 0
        %821 = vmatprep.subr.bf16.mxu0 0
        %822 = vmatpush2.bf16.msra.mxu0 0
        %823 = vmatprep.mubr.bf16.mxu0 0
        %824 = vmatmul.mubr.bf16.gmra.mxu0 %v724
        %v825 = vpop.f32.mrf.mxu0
        %v826 = vadd.f32 %v777, %v825
        %v827 = vpop.f32.mrf.mxu0
        %v828 = vpop.f32.mrf.mxu0
        %v829 = vpop.f32.mrf.mxu0
        %830 = vdwg.mxu0
        %s831 = scalar_lea.vmem %s648, 64
        %v832 = vld [vmem:[%s831] sm:$0xf]
        %v833 = vld [vmem:[%s831 + $0x4] sm:$0xf]
        %v834 = vld [vmem:[%s831 + $0x8] sm:$0xf]
        %v835 = vld [vmem:[%s831 + $0xc] sm:$0xf]
        %s836 = scalar_lea.vmem %s652, 4
        %v837 = vld [vmem:[%s836] sm:$0x1]
        %v839 = vlaneseq
        %v840 = vshrl.u32 %v839, 7
        %v841 = vsub.s32 0, %v840
        %v842 = vrot.slane %v837, %v841
        %v848 = vunpack.c.l.b16 %v832
        %v849 = vunpack.c.l.b16 %v833
        %v850 = vunpack.c.l.b16 %v834
        %v851 = vunpack.c.l.b16 %v835
        %v852 = vpack.c.b16 %v849, %v848
        %v853 = vpack.c.b16 %v851, %v850
        %856 = vmatprep.subr.bf16.mxu0 0
        %857 = vmatpush1.bf16.msra.mxu0 0
        %858 = vmatprep.subr.bf16.mxu0 0
        %859 = vmatpush1.bf16.msra.mxu0 0
        %860 = vmatprep.subr.bf16.mxu0 0
        %861 = vmatpush1.bf16.msra.mxu0 0
        %862 = vmatprep.subr.bf16.mxu0 0
        %863 = vmatpush1.bf16.msra.mxu0 0
        %864 = vmatprep.subr.bf16.mxu0 0
        %865 = vmatpush1.bf16.msra.mxu0 0
        %866 = vmatprep.subr.bf16.mxu0 0
        %867 = vmatpush1.bf16.msra.mxu0 0
        %868 = vmatprep.subr.bf16.mxu0 0
        %869 = vmatpush1.bf16.msra.mxu0 %v853
        %870 = vmatprep.subr.bf16.mxu0 0
        %871 = vmatpush1.bf16.msra.mxu0 %v852
        %872 = vmatprep.subr.bf16.mxu0 0
        %873 = vmatpush2.bf16.msra.mxu0 0
        %874 = vmatprep.subr.bf16.mxu0 0
        %875 = vmatpush2.bf16.msra.mxu0 0
        %876 = vmatprep.subr.bf16.mxu0 0
        %877 = vmatpush2.bf16.msra.mxu0 0
        %878 = vmatprep.subr.bf16.mxu0 0
        %879 = vmatpush2.bf16.msra.mxu0 0
        %880 = vmatprep.subr.bf16.mxu0 0
        %881 = vmatpush2.bf16.msra.mxu0 0
        %882 = vmatprep.subr.bf16.mxu0 0
        %883 = vmatpush2.bf16.msra.mxu0 0
        %884 = vmatprep.subr.bf16.mxu0 0
        %885 = vmatpush2.bf16.msra.mxu0 0
        %886 = vmatprep.subr.bf16.mxu0 0
        %887 = vmatpush2.bf16.msra.mxu0 0
        %888 = vmatprep.mubr.bf16.mxu0 0
        %889 = vmatmul.mubr.bf16.gmra.mxu0 %v724
        %v890 = vpop.f32.mrf.mxu0
        %v891 = vadd.f32 %v842, %v890
        %v892 = vpop.f32.mrf.mxu0
        %v893 = vpop.f32.mrf.mxu0
        %v894 = vpop.f32.mrf.mxu0
        %895 = vdwg.mxu0
        %v896 = vpack.c.bf16 %v761, %v761
        %v897 = vpack.c.bf16 %v826, %v826
        %vm898 = vcmask 130048
        %v900 = vsel %vm898, %v896, 0
        %v903 = vsel %vm898, %v897, 0
        %905 = vmatprep.subr.bf16.mxu0 0
        %906 = vmatpush1.bf16.xpose.msra.mxu0 0
        %907 = vmatprep.subr.bf16.mxu0 0
        %908 = vmatpush1.bf16.xpose.msra.mxu0 0
        %909 = vmatprep.subr.bf16.mxu0 0
        %910 = vmatpush1.bf16.xpose.msra.mxu0 0
        %911 = vmatprep.subr.bf16.mxu0 0
        %912 = vmatpush1.bf16.xpose.msra.mxu0 0
        %913 = vmatprep.subr.bf16.mxu0 0
        %914 = vmatpush1.bf16.xpose.msra.mxu0 0
        %915 = vmatprep.subr.bf16.mxu0 0
        %916 = vmatpush1.bf16.xpose.msra.mxu0 0
        %917 = vmatprep.subr.bf16.mxu0 0
        %918 = vmatpush1.bf16.xpose.msra.mxu0 0
        %919 = vmatprep.subr.bf16.mxu0 0
        %920 = vmatpush1.bf16.xpose.msra.mxu0 %v903
        %921 = vmatprep.subr.bf16.mxu0 0
        %922 = vmatpush2.bf16.xpose.msra.mxu0 0
        %923 = vmatprep.subr.bf16.mxu0 0
        %924 = vmatpush2.bf16.xpose.msra.mxu0 0
        %925 = vmatprep.subr.bf16.mxu0 0
        %926 = vmatpush2.bf16.xpose.msra.mxu0 0
        %927 = vmatprep.subr.bf16.mxu0 0
        %928 = vmatpush2.bf16.xpose.msra.mxu0 0
        %929 = vmatprep.subr.bf16.mxu0 0
        %930 = vmatpush2.bf16.xpose.msra.mxu0 0
        %931 = vmatprep.subr.bf16.mxu0 0
        %932 = vmatpush2.bf16.xpose.msra.mxu0 0
        %933 = vmatprep.subr.bf16.mxu0 0
        %934 = vmatpush2.bf16.xpose.msra.mxu0 0
        %935 = vmatprep.subr.bf16.mxu0 0
        %936 = vmatpush2.bf16.xpose.msra.mxu0 0
        %937 = vmatprep.mubr.bf16.mxu0 0
        %938 = vmatmul.mubr.bf16.gmra.mxu0 %v900
        %v939 = vpop.f32.mrf.mxu0
        %v940 = vadd.f32 0.0, %v939
        %v941 = vpop.f32.mrf.mxu0
        %v942 = vpop.f32.mrf.mxu0
        %v943 = vpop.f32.mrf.mxu0
        %944 = vdwg.mxu0
        %v945 = vmul.f32 %v940, 0.25
        %v947 = vlaneseq
        %v948 = vshrl.u32 %v947, 7
        %v949 = vsub.s32 0, %v948
        %v950 = vrot.slane %v697, %v949
        %v952 = vadd.f32 %v945, %v950
        %vm953 = vcmask 64512
        %v954 = vsel %vm953, %v952, -inf
        %955 = vmax.xlane.f32.xlu0 %v954
        %v956 = vpop.xlane.xlu0 %955
        %v957 = vsub.f32 %v952, %v956
        %v958 = vmul.f32 %v957, 1.442695
        %v959 = vpow.pop %v958
        %v960 = vsel %vm953, %v959, 0.0
        %961 = vadd.xlane.f32.xlu0 %v960
        %v962 = vpop.xlane.xlu0 %961
        %v963 = vpack.c.bf16 %v959, %v959
        %v964 = vpack.c.bf16 %v891, %v891
        %v966 = vsel %vm953, %v963, 0
        %vm968 = vcmask 1043456
        %v970 = vsel %vm968, %v964, 0
        %972 = vmatprep.subr.bf16.mxu0 0
        %973 = vmatpush1.bf16.msra.mxu0 0
        %974 = vmatprep.subr.bf16.mxu0 0
        %975 = vmatpush1.bf16.msra.mxu0 0
        %976 = vmatprep.subr.bf16.mxu0 0
        %977 = vmatpush1.bf16.msra.mxu0 0
        %978 = vmatprep.subr.bf16.mxu0 0
        %979 = vmatpush1.bf16.msra.mxu0 0
        %980 = vmatprep.subr.bf16.mxu0 0
        %981 = vmatpush1.bf16.msra.mxu0 0
        %982 = vmatprep.subr.bf16.mxu0 0
        %983 = vmatpush1.bf16.msra.mxu0 0
        %984 = vmatprep.subr.bf16.mxu0 0
        %985 = vmatpush1.bf16.msra.mxu0 0
        %986 = vmatprep.subr.bf16.mxu0 0
        %987 = vmatpush1.bf16.msra.mxu0 %v970
        %988 = vmatprep.subr.bf16.mxu0 0
        %989 = vmatpush2.bf16.msra.mxu0 0
        %990 = vmatprep.subr.bf16.mxu0 0
        %991 = vmatpush2.bf16.msra.mxu0 0
        %992 = vmatprep.subr.bf16.mxu0 0
        %993 = vmatpush2.bf16.msra.mxu0 0
        %994 = vmatprep.subr.bf16.mxu0 0
        %995 = vmatpush2.bf16.msra.mxu0 0
        %996 = vmatprep.subr.bf16.mxu0 0
        %997 = vmatpush2.bf16.msra.mxu0 0
        %998 = vmatprep.subr.bf16.mxu0 0
        %999 = vmatpush2.bf16.msra.mxu0 0
        %1000 = vmatprep.subr.bf16.mxu0 0
        %1001 = vmatpush2.bf16.msra.mxu0 0
        %1002 = vmatprep.subr.bf16.mxu0 0
        %1003 = vmatpush2.bf16.msra.mxu0 0
        %1004 = vmatprep.mubr.bf16.mxu0 0
        %1005 = vmatmul.mubr.bf16.gmra.mxu0 %v966
        %v1006 = vpop.f32.mrf.mxu0
        %v1007 = vadd.f32 0.0, %v1006
        %v1008 = vpop.f32.mrf.mxu0
        %v1009 = vpop.f32.mrf.mxu0
        %v1010 = vpop.f32.mrf.mxu0
        %1011 = vdwg.mxu0
        %v1012 = vrcp.pop %v962
        %v1013 = vmul.f32 %v1007, %v1012
        %v1014 = vpack.c.bf16 %v1013, %v1013
        %v1015 = vld [vmem:[%s657] sm:$0xf]
        %v1016 = vld [vmem:[%s657 + $0x4] sm:$0xf]
        %s1017 = scalar_lea.vmem %s648, 16
        %v1018 = vld [vmem:[%s1017] sm:$0xf]
        %v1019 = vld [vmem:[%s1017 + $0x4] sm:$0xf]
        %v1020 = vld [vmem:[%s1017 + $0x8] sm:$0xf]
        %v1021 = vld [vmem:[%s1017 + $0xc] sm:$0xf]
        %s1022 = scalar_lea.vmem %s652, 1
        %v1023 = vld [vmem:[%s1022] sm:$0x1]
        %v1025 = vlaneseq
        %v1026 = vshrl.u32 %v1025, 7
        %v1027 = vsub.s32 0, %v1026
        %v1028 = vrot.slane %v1023, %v1027
        %v1034 = vunpack.c.l.b16 %v1018
        %v1035 = vunpack.c.l.b16 %v1019
        %v1036 = vunpack.c.l.b16 %v1020
        %v1037 = vunpack.c.l.b16 %v1021
        %v1038 = vpack.c.b16 %v1035, %v1034
        %v1039 = vpack.c.b16 %v1037, %v1036
        %1042 = vmatprep.subr.bf16.mxu0 0
        %1043 = vmatpush1.bf16.msra.mxu0 0
        %1044 = vmatprep.subr.bf16.mxu0 0
        %1045 = vmatpush1.bf16.msra.mxu0 0
        %1046 = vmatprep.subr.bf16.mxu0 0
        %1047 = vmatpush1.bf16.msra.mxu0 0
        %1048 = vmatprep.subr.bf16.mxu0 0
        %1049 = vmatpush1.bf16.msra.mxu0 0
        %1050 = vmatprep.subr.bf16.mxu0 0
        %1051 = vmatpush1.bf16.msra.mxu0 0
        %1052 = vmatprep.subr.bf16.mxu0 0
        %1053 = vmatpush1.bf16.msra.mxu0 0
        %1054 = vmatprep.subr.bf16.mxu0 0
        %1055 = vmatpush1.bf16.msra.mxu0 %v1039
        %1056 = vmatprep.subr.bf16.mxu0 0
        %1057 = vmatpush1.bf16.msra.mxu0 %v1038
        %1058 = vmatprep.subr.bf16.mxu0 0
        %1059 = vmatpush2.bf16.msra.mxu0 0
        %1060 = vmatprep.subr.bf16.mxu0 0
        %1061 = vmatpush2.bf16.msra.mxu0 0
        %1062 = vmatprep.subr.bf16.mxu0 0
        %1063 = vmatpush2.bf16.msra.mxu0 0
        %1064 = vmatprep.subr.bf16.mxu0 0
        %1065 = vmatpush2.bf16.msra.mxu0 0
        %1066 = vmatprep.subr.bf16.mxu0 0
        %1067 = vmatpush2.bf16.msra.mxu0 0
        %1068 = vmatprep.subr.bf16.mxu0 0
        %1069 = vmatpush2.bf16.msra.mxu0 0
        %1070 = vmatprep.subr.bf16.mxu0 0
        %1071 = vmatpush2.bf16.msra.mxu0 0
        %1072 = vmatprep.subr.bf16.mxu0 0
        %1073 = vmatpush2.bf16.msra.mxu0 0
        %1074 = vmatprep.mubr.bf16.mxu0 0
        %1075 = vmatmul.mubr.bf16.gmra.mxu0 %v724
        %v1076 = vpop.f32.mrf.mxu0
        %v1077 = vadd.f32 %v1028, %v1076
        %v1078 = vpop.f32.mrf.mxu0
        %v1079 = vpop.f32.mrf.mxu0
        %v1080 = vpop.f32.mrf.mxu0
        %1081 = vdwg.mxu0
        %s1082 = scalar_lea.vmem %s648, 48
        %v1083 = vld [vmem:[%s1082] sm:$0xf]
        %v1084 = vld [vmem:[%s1082 + $0x4] sm:$0xf]
        %v1085 = vld [vmem:[%s1082 + $0x8] sm:$0xf]
        %v1086 = vld [vmem:[%s1082 + $0xc] sm:$0xf]
        %s1087 = scalar_lea.vmem %s652, 3
        %v1088 = vld [vmem:[%s1087] sm:$0x1]
        %v1090 = vlaneseq
        %v1091 = vshrl.u32 %v1090, 7
        %v1092 = vsub.s32 0, %v1091
        %v1093 = vrot.slane %v1088, %v1092
        %v1099 = vunpack.c.l.b16 %v1083
        %v1100 = vunpack.c.l.b16 %v1084
        %v1101 = vunpack.c.l.b16 %v1085
        %v1102 = vunpack.c.l.b16 %v1086
        %v1103 = vpack.c.b16 %v1100, %v1099
        %v1104 = vpack.c.b16 %v1102, %v1101
        %1107 = vmatprep.subr.bf16.mxu0 0
        %1108 = vmatpush1.bf16.msra.mxu0 0
        %1109 = vmatprep.subr.bf16.mxu0 0
        %1110 = vmatpush1.bf16.msra.mxu0 0
        %1111 = vmatprep.subr.bf16.mxu0 0
        %1112 = vmatpush1.bf16.msra.mxu0 0
        %1113 = vmatprep.subr.bf16.mxu0 0
        %1114 = vmatpush1.bf16.msra.mxu0 0
        %1115 = vmatprep.subr.bf16.mxu0 0
        %1116 = vmatpush1.bf16.msra.mxu0 0
        %1117 = vmatprep.subr.bf16.mxu0 0
        %1118 = vmatpush1.bf16.msra.mxu0 0
        %1119 = vmatprep.subr.bf16.mxu0 0
        %1120 = vmatpush1.bf16.msra.mxu0 %v1104
        %1121 = vmatprep.subr.bf16.mxu0 0
        %1122 = vmatpush1.bf16.msra.mxu0 %v1103
        %1123 = vmatprep.subr.bf16.mxu0 0
        %1124 = vmatpush2.bf16.msra.mxu0 0
        %1125 = vmatprep.subr.bf16.mxu0 0
        %1126 = vmatpush2.bf16.msra.mxu0 0
        %1127 = vmatprep.subr.bf16.mxu0 0
        %1128 = vmatpush2.bf16.msra.mxu0 0
        %1129 = vmatprep.subr.bf16.mxu0 0
        %1130 = vmatpush2.bf16.msra.mxu0 0
        %1131 = vmatprep.subr.bf16.mxu0 0
        %1132 = vmatpush2.bf16.msra.mxu0 0
        %1133 = vmatprep.subr.bf16.mxu0 0
        %1134 = vmatpush2.bf16.msra.mxu0 0
        %1135 = vmatprep.subr.bf16.mxu0 0
        %1136 = vmatpush2.bf16.msra.mxu0 0
        %1137 = vmatprep.subr.bf16.mxu0 0
        %1138 = vmatpush2.bf16.msra.mxu0 0
        %1139 = vmatprep.mubr.bf16.mxu0 0
        %1140 = vmatmul.mubr.bf16.gmra.mxu0 %v724
        %v1141 = vpop.f32.mrf.mxu0
        %v1142 = vadd.f32 %v1093, %v1141
        %v1143 = vpop.f32.mrf.mxu0
        %v1144 = vpop.f32.mrf.mxu0
        %v1145 = vpop.f32.mrf.mxu0
        %1146 = vdwg.mxu0
        %s1147 = scalar_lea.vmem %s648, 80
        %v1148 = vld [vmem:[%s1147] sm:$0xf]
        %v1149 = vld [vmem:[%s1147 + $0x4] sm:$0xf]
        %v1150 = vld [vmem:[%s1147 + $0x8] sm:$0xf]
        %v1151 = vld [vmem:[%s1147 + $0xc] sm:$0xf]
        %s1152 = scalar_lea.vmem %s652, 5
        %v1153 = vld [vmem:[%s1152] sm:$0x1]
        %v1155 = vlaneseq
        %v1156 = vshrl.u32 %v1155, 7
        %v1157 = vsub.s32 0, %v1156
        %v1158 = vrot.slane %v1153, %v1157
        %v1164 = vunpack.c.l.b16 %v1148
        %v1165 = vunpack.c.l.b16 %v1149
        %v1166 = vunpack.c.l.b16 %v1150
        %v1167 = vunpack.c.l.b16 %v1151
        %v1168 = vpack.c.b16 %v1165, %v1164
        %v1169 = vpack.c.b16 %v1167, %v1166
        %1172 = vmatprep.subr.bf16.mxu0 0
        %1173 = vmatpush1.bf16.msra.mxu0 0
        %1174 = vmatprep.subr.bf16.mxu0 0
        %1175 = vmatpush1.bf16.msra.mxu0 0
        %1176 = vmatprep.subr.bf16.mxu0 0
        %1177 = vmatpush1.bf16.msra.mxu0 0
        %1178 = vmatprep.subr.bf16.mxu0 0
        %1179 = vmatpush1.bf16.msra.mxu0 0
        %1180 = vmatprep.subr.bf16.mxu0 0
        %1181 = vmatpush1.bf16.msra.mxu0 0
        %1182 = vmatprep.subr.bf16.mxu0 0
        %1183 = vmatpush1.bf16.msra.mxu0 0
        %1184 = vmatprep.subr.bf16.mxu0 0
        %1185 = vmatpush1.bf16.msra.mxu0 %v1169
        %1186 = vmatprep.subr.bf16.mxu0 0
        %1187 = vmatpush1.bf16.msra.mxu0 %v1168
        %1188 = vmatprep.subr.bf16.mxu0 0
        %1189 = vmatpush2.bf16.msra.mxu0 0
        %1190 = vmatprep.subr.bf16.mxu0 0
        %1191 = vmatpush2.bf16.msra.mxu0 0
        %1192 = vmatprep.subr.bf16.mxu0 0
        %1193 = vmatpush2.bf16.msra.mxu0 0
        %1194 = vmatprep.subr.bf16.mxu0 0
        %1195 = vmatpush2.bf16.msra.mxu0 0
        %1196 = vmatprep.subr.bf16.mxu0 0
        %1197 = vmatpush2.bf16.msra.mxu0 0
        %1198 = vmatprep.subr.bf16.mxu0 0
        %1199 = vmatpush2.bf16.msra.mxu0 0
        %1200 = vmatprep.subr.bf16.mxu0 0
        %1201 = vmatpush2.bf16.msra.mxu0 0
        %1202 = vmatprep.subr.bf16.mxu0 0
        %1203 = vmatpush2.bf16.msra.mxu0 0
        %1204 = vmatprep.mubr.bf16.mxu0 0
        %1205 = vmatmul.mubr.bf16.gmra.mxu0 %v724
        %v1206 = vpop.f32.mrf.mxu0
        %v1207 = vadd.f32 %v1158, %v1206
        %v1208 = vpop.f32.mrf.mxu0
        %v1209 = vpop.f32.mrf.mxu0
        %v1210 = vpop.f32.mrf.mxu0
        %1211 = vdwg.mxu0
        %v1212 = vpack.c.bf16 %v1077, %v1077
        %v1213 = vpack.c.bf16 %v1142, %v1142
        %v1215 = vsel %vm898, %v1212, 0
        %v1218 = vsel %vm898, %v1213, 0
        %1220 = vmatprep.subr.bf16.mxu0 0
        %1221 = vmatpush1.bf16.xpose.msra.mxu0 0
        %1222 = vmatprep.subr.bf16.mxu0 0
        %1223 = vmatpush1.bf16.xpose.msra.mxu0 0
        %1224 = vmatprep.subr.bf16.mxu0 0
        %1225 = vmatpush1.bf16.xpose.msra.mxu0 0
        %1226 = vmatprep.subr.bf16.mxu0 0
        %1227 = vmatpush1.bf16.xpose.msra.mxu0 0
        %1228 = vmatprep.subr.bf16.mxu0 0
        %1229 = vmatpush1.bf16.xpose.msra.mxu0 0
        %1230 = vmatprep.subr.bf16.mxu0 0
        %1231 = vmatpush1.bf16.xpose.msra.mxu0 0
        %1232 = vmatprep.subr.bf16.mxu0 0
        %1233 = vmatpush1.bf16.xpose.msra.mxu0 0
        %1234 = vmatprep.subr.bf16.mxu0 0
        %1235 = vmatpush1.bf16.xpose.msra.mxu0 %v1218
        %1236 = vmatprep.subr.bf16.mxu0 0
        %1237 = vmatpush2.bf16.xpose.msra.mxu0 0
        %1238 = vmatprep.subr.bf16.mxu0 0
        %1239 = vmatpush2.bf16.xpose.msra.mxu0 0
        %1240 = vmatprep.subr.bf16.mxu0 0
        %1241 = vmatpush2.bf16.xpose.msra.mxu0 0
        %1242 = vmatprep.subr.bf16.mxu0 0
        %1243 = vmatpush2.bf16.xpose.msra.mxu0 0
        %1244 = vmatprep.subr.bf16.mxu0 0
        %1245 = vmatpush2.bf16.xpose.msra.mxu0 0
        %1246 = vmatprep.subr.bf16.mxu0 0
        %1247 = vmatpush2.bf16.xpose.msra.mxu0 0
        %1248 = vmatprep.subr.bf16.mxu0 0
        %1249 = vmatpush2.bf16.xpose.msra.mxu0 0
        %1250 = vmatprep.subr.bf16.mxu0 0
        %1251 = vmatpush2.bf16.xpose.msra.mxu0 0
        %1252 = vmatprep.mubr.bf16.mxu0 0
        %1253 = vmatmul.mubr.bf16.gmra.mxu0 %v1215
        %v1254 = vpop.f32.mrf.mxu0
        %v1255 = vadd.f32 0.0, %v1254
        %v1256 = vpop.f32.mrf.mxu0
        %v1257 = vpop.f32.mrf.mxu0
        %v1258 = vpop.f32.mrf.mxu0
        %1259 = vdwg.mxu0
        %v1260 = vmul.f32 %v1255, 0.25
        %v1261 = vadd.f32 %v1260, %v950
        %v1262 = vsel %vm953, %v1261, -inf
        %1263 = vmax.xlane.f32.xlu0 %v1262
        %v1264 = vpop.xlane.xlu0 %1263
        %v1265 = vsub.f32 %v1261, %v1264
        %v1266 = vmul.f32 %v1265, 1.442695
        %v1267 = vpow.pop %v1266
        %v1268 = vsel %vm953, %v1267, 0.0
        %1269 = vadd.xlane.f32.xlu0 %v1268
        %v1270 = vpop.xlane.xlu0 %1269
        %v1271 = vpack.c.bf16 %v1267, %v1267
        %v1272 = vpack.c.bf16 %v1207, %v1207
        %v1274 = vsel %vm953, %v1271, 0
        %v1277 = vsel %vm968, %v1272, 0
        %1279 = vmatprep.subr.bf16.mxu0 0
        %1280 = vmatpush1.bf16.msra.mxu0 0
        %1281 = vmatprep.subr.bf16.mxu0 0
        %1282 = vmatpush1.bf16.msra.mxu0 0
        %1283 = vmatprep.subr.bf16.mxu0 0
        %1284 = vmatpush1.bf16.msra.mxu0 0
        %1285 = vmatprep.subr.bf16.mxu0 0
        %1286 = vmatpush1.bf16.msra.mxu0 0
        %1287 = vmatprep.subr.bf16.mxu0 0
        %1288 = vmatpush1.bf16.msra.mxu0 0
        %1289 = vmatprep.subr.bf16.mxu0 0
        %1290 = vmatpush1.bf16.msra.mxu0 0
        %1291 = vmatprep.subr.bf16.mxu0 0
        %1292 = vmatpush1.bf16.msra.mxu0 0
        %1293 = vmatprep.subr.bf16.mxu0 0
        %1294 = vmatpush1.bf16.msra.mxu0 %v1277
        %1295 = vmatprep.subr.bf16.mxu0 0
        %1296 = vmatpush2.bf16.msra.mxu0 0
        %1297 = vmatprep.subr.bf16.mxu0 0
        %1298 = vmatpush2.bf16.msra.mxu0 0
        %1299 = vmatprep.subr.bf16.mxu0 0
        %1300 = vmatpush2.bf16.msra.mxu0 0
        %1301 = vmatprep.subr.bf16.mxu0 0
        %1302 = vmatpush2.bf16.msra.mxu0 0
        %1303 = vmatprep.subr.bf16.mxu0 0
        %1304 = vmatpush2.bf16.msra.mxu0 0
        %1305 = vmatprep.subr.bf16.mxu0 0
        %1306 = vmatpush2.bf16.msra.mxu0 0
        %1307 = vmatprep.subr.bf16.mxu0 0
        %1308 = vmatpush2.bf16.msra.mxu0 0
        %1309 = vmatprep.subr.bf16.mxu0 0
        %1310 = vmatpush2.bf16.msra.mxu0 0
        %1311 = vmatprep.mubr.bf16.mxu0 0
        %1312 = vmatmul.mubr.bf16.gmra.mxu0 %v1274
        %v1313 = vpop.f32.mrf.mxu0
        %v1314 = vadd.f32 0.0, %v1313
        %v1315 = vpop.f32.mrf.mxu0
        %v1316 = vpop.f32.mrf.mxu0
        %v1317 = vpop.f32.mrf.mxu0
        %1318 = vdwg.mxu0
        %v1319 = vrcp.pop %v1270
        %v1320 = vmul.f32 %v1314, %v1319
        %v1321 = vpack.c.bf16 %v1320, %v1320
        %s1322 = scalar_lea.vmem %s657, 8
        %v1323 = vld [vmem:[%s1322] sm:$0xf]
        %v1324 = vld [vmem:[%s1322 + $0x4] sm:$0xf]
        %v1327 = vunpack.c.l.b16 %v1323
        %v1328 = vunpack.c.l.b16 %v1324
        %v1329 = vpack.c.b16 %v1328, %v1327
        %v1332 = vsel %vm898, %v1321, 0
        %1334 = vmatprep.subr.bf16.mxu0 0
        %1335 = vmatpush1.bf16.msra.mxu0 0
        %1336 = vmatprep.subr.bf16.mxu0 0
        %1337 = vmatpush1.bf16.msra.mxu0 0
        %1338 = vmatprep.subr.bf16.mxu0 0
        %1339 = vmatpush1.bf16.msra.mxu0 0
        %1340 = vmatprep.subr.bf16.mxu0 0
        %1341 = vmatpush1.bf16.msra.mxu0 0
        %1342 = vmatprep.subr.bf16.mxu0 0
        %1343 = vmatpush1.bf16.msra.mxu0 0
        %1344 = vmatprep.subr.bf16.mxu0 0
        %1345 = vmatpush1.bf16.msra.mxu0 0
        %1346 = vmatprep.subr.bf16.mxu0 0
        %1347 = vmatpush1.bf16.msra.mxu0 0
        %1348 = vmatprep.subr.bf16.mxu0 0
        %1349 = vmatpush1.bf16.msra.mxu0 %v1329
        %1350 = vmatprep.subr.bf16.mxu0 0
        %1351 = vmatpush2.bf16.msra.mxu0 0
        %1352 = vmatprep.subr.bf16.mxu0 0
        %1353 = vmatpush2.bf16.msra.mxu0 0
        %1354 = vmatprep.subr.bf16.mxu0 0
        %1355 = vmatpush2.bf16.msra.mxu0 0
        %1356 = vmatprep.subr.bf16.mxu0 0
        %1357 = vmatpush2.bf16.msra.mxu0 0
        %1358 = vmatprep.subr.bf16.mxu0 0
        %1359 = vmatpush2.bf16.msra.mxu0 0
        %1360 = vmatprep.subr.bf16.mxu0 0
        %1361 = vmatpush2.bf16.msra.mxu0 0
        %1362 = vmatprep.subr.bf16.mxu0 0
        %1363 = vmatpush2.bf16.msra.mxu0 0
        %1364 = vmatprep.subr.bf16.mxu0 0
        %1365 = vmatpush2.bf16.msra.mxu0 0
        %1366 = vmatprep.mubr.bf16.mxu0 0
        %1367 = vmatmul.mubr.bf16.gmra.mxu0 %v1332
        %v1368 = vpop.f32.mrf.mxu0
        %v1369 = vadd.f32 0.0, %v1368
        %v1370 = vpop.f32.mrf.mxu0
        %v1371 = vpop.f32.mrf.mxu0
        %v1372 = vpop.f32.mrf.mxu0
        %1373 = vdwg.mxu0
        %v1376 = vunpack.c.l.b16 %v1015
        %v1377 = vunpack.c.l.b16 %v1016
        %v1378 = vpack.c.b16 %v1377, %v1376
        %v1381 = vsel %vm898, %v1014, 0
        %1383 = vmatprep.subr.bf16.mxu0 0
        %1384 = vmatpush1.bf16.msra.mxu0 0
        %1385 = vmatprep.subr.bf16.mxu0 0
        %1386 = vmatpush1.bf16.msra.mxu0 0
        %1387 = vmatprep.subr.bf16.mxu0 0
        %1388 = vmatpush1.bf16.msra.mxu0 0
        %1389 = vmatprep.subr.bf16.mxu0 0
        %1390 = vmatpush1.bf16.msra.mxu0 0
        %1391 = vmatprep.subr.bf16.mxu0 0
        %1392 = vmatpush1.bf16.msra.mxu0 0
        %1393 = vmatprep.subr.bf16.mxu0 0
        %1394 = vmatpush1.bf16.msra.mxu0 0
        %1395 = vmatprep.subr.bf16.mxu0 0
        %1396 = vmatpush1.bf16.msra.mxu0 0
        %1397 = vmatprep.subr.bf16.mxu0 0
        %1398 = vmatpush1.bf16.msra.mxu0 %v1378
        %1399 = vmatprep.subr.bf16.mxu0 0
        %1400 = vmatpush2.bf16.msra.mxu0 0
        %1401 = vmatprep.subr.bf16.mxu0 0
        %1402 = vmatpush2.bf16.msra.mxu0 0
        %1403 = vmatprep.subr.bf16.mxu0 0
        %1404 = vmatpush2.bf16.msra.mxu0 0
        %1405 = vmatprep.subr.bf16.mxu0 0
        %1406 = vmatpush2.bf16.msra.mxu0 0
        %1407 = vmatprep.subr.bf16.mxu0 0
        %1408 = vmatpush2.bf16.msra.mxu0 0
        %1409 = vmatprep.subr.bf16.mxu0 0
        %1410 = vmatpush2.bf16.msra.mxu0 0
        %1411 = vmatprep.subr.bf16.mxu0 0
        %1412 = vmatpush2.bf16.msra.mxu0 0
        %1413 = vmatprep.subr.bf16.mxu0 0
        %1414 = vmatpush2.bf16.msra.mxu0 0
        %1415 = vmatprep.mubr.bf16.mxu0 0
        %1416 = vmatmul.mubr.bf16.gmra.mxu0 %v1381
        %v1417 = vpop.f32.mrf.mxu0
        %v1418 = vadd.f32 %v1369, %v1417
        %v1419 = vpop.f32.mrf.mxu0
        %v1420 = vpop.f32.mrf.mxu0
        %v1421 = vpop.f32.mrf.mxu0
        %1422 = vdwg.mxu0
        %v1423 = vlaneseq
        %v1424 = vshrl.u32 %v1423, 7
        %v1425 = vsub.s32 0, %v1424
        %v1426 = vrot.slane %v698, %v1425
        %v1427 = vadd.f32 %v1418, %v1426
        %v1428 = vadd.f32 %v1427, %v695
        %v1429 = vsel %vm722, %v1428, 0.0
        %1430 = vadd.xlane.f32.xlu0 %v1429
        %v1431 = vpop.xlane.xlu0 %1430
        %v1432 = vrcp.pop 32.0
        %v1433 = vmul.f32 %v1431, %v1432
        %v1434 = vsub.f32 %v1428, %v1433
        %v1435 = vmul.f32 %v1434, %v1434
        %v1436 = vsel %vm722, %v1435, 0.0
        %1437 = vadd.xlane.f32.xlu0 %v1436
        %v1438 = vpop.xlane.xlu0 %1437
        %v1439 = vmul.f32 %v1438, %v1432
        %v1440 = vadd.f32 %v1439, 1e-12
        %v1441 = vrsqrt.pop %v1440
        %v1442 = vmul.f32 %v1434, %v1441
        %v1443 = vlaneseq
        %v1444 = vshrl.u32 %v1443, 7
        %v1445 = vsub.s32 1, %v1444
        %v1446 = vrot.slane %v698, %v1445
        %v1447 = vmul.f32 %v1442, %v1446
        %v1448 = vlaneseq
        %v1449 = vshrl.u32 %v1448, 7
        %v1450 = vsub.s32 2, %v1449
        %v1451 = vrot.slane %v698, %v1450
        %v1452 = vadd.f32 %v1447, %v1451
        %v1453 = vpack.c.bf16 %v1452, %v1452
        %v1454 = vld [vmem:[%s548] sm:$0xf]
        %v1455 = vld [vmem:[%s548 + $0x4] sm:$0xf]
        %v1456 = vld [vmem:[%s548 + $0x8] sm:$0xf]
        %v1457 = vld [vmem:[%s548 + $0xc] sm:$0xf]
        %v1458 = vld [vmem:[%s660] sm:$0x1]
        %v1460 = vlaneseq
        %v1461 = vshrl.u32 %v1460, 7
        %v1462 = vsub.s32 0, %v1461
        %v1463 = vrot.slane %v1458, %v1462
        %v1469 = vunpack.c.l.b16 %v1454
        %v1470 = vunpack.c.l.b16 %v1455
        %v1471 = vunpack.c.l.b16 %v1456
        %v1472 = vunpack.c.l.b16 %v1457
        %v1473 = vpack.c.b16 %v1470, %v1469
        %v1474 = vpack.c.b16 %v1472, %v1471
        %v1478 = vsel %vm722, %v1453, 0
        %1480 = vmatprep.subr.bf16.mxu0 0
        %1481 = vmatpush1.bf16.msra.mxu0 0
        %1482 = vmatprep.subr.bf16.mxu0 0
        %1483 = vmatpush1.bf16.msra.mxu0 0
        %1484 = vmatprep.subr.bf16.mxu0 0
        %1485 = vmatpush1.bf16.msra.mxu0 0
        %1486 = vmatprep.subr.bf16.mxu0 0
        %1487 = vmatpush1.bf16.msra.mxu0 0
        %1488 = vmatprep.subr.bf16.mxu0 0
        %1489 = vmatpush1.bf16.msra.mxu0 0
        %1490 = vmatprep.subr.bf16.mxu0 0
        %1491 = vmatpush1.bf16.msra.mxu0 0
        %1492 = vmatprep.subr.bf16.mxu0 0
        %1493 = vmatpush1.bf16.msra.mxu0 %v1474
        %1494 = vmatprep.subr.bf16.mxu0 0
        %1495 = vmatpush1.bf16.msra.mxu0 %v1473
        %1496 = vmatprep.subr.bf16.mxu0 0
        %1497 = vmatpush2.bf16.msra.mxu0 0
        %1498 = vmatprep.subr.bf16.mxu0 0
        %1499 = vmatpush2.bf16.msra.mxu0 0
        %1500 = vmatprep.subr.bf16.mxu0 0
        %1501 = vmatpush2.bf16.msra.mxu0 0
        %1502 = vmatprep.subr.bf16.mxu0 0
        %1503 = vmatpush2.bf16.msra.mxu0 0
        %1504 = vmatprep.subr.bf16.mxu0 0
        %1505 = vmatpush2.bf16.msra.mxu0 0
        %1506 = vmatprep.subr.bf16.mxu0 0
        %1507 = vmatpush2.bf16.msra.mxu0 0
        %1508 = vmatprep.subr.bf16.mxu0 0
        %1509 = vmatpush2.bf16.msra.mxu0 0
        %1510 = vmatprep.subr.bf16.mxu0 0
        %1511 = vmatpush2.bf16.msra.mxu0 0
        %1512 = vmatprep.mubr.bf16.mxu0 0
        %1513 = vmatmul.mubr.bf16.gmra.mxu0 %v1478
        %v1514 = vpop.f32.mrf.mxu0
        %v1515 = vadd.f32 %v1463, %v1514
        %v1516 = vpop.f32.mrf.mxu0
        %v1517 = vpop.f32.mrf.mxu0
        %v1518 = vpop.f32.mrf.mxu0
        %1519 = vdwg.mxu0
        %v1520 = vmul.f32 %v1515, %v1515
        %v1521 = vmul.f32 %v1515, %v1520
        %v1522 = vmul.f32 %v1521, 0.044715
        %v1523 = vadd.f32 %v1515, %v1522
        %v1524 = vmul.f32 %v1523, 0.7978846
        %v1525 = vtanh.pop %v1524
        %v1526 = vadd.f32 %v1525, 1.0
        %v1527 = vmul.f32 %v1526, 0.5
        %v1528 = vmul.f32 %v1515, %v1527
        %v1529 = vpack.c.bf16 %v1528, %v1528
        %v1530 = vld [vmem:[%s557] sm:$0xf]
        %v1531 = vld [vmem:[%s557 + $0x4] sm:$0xf]
        %v1532 = vld [vmem:[%s557 + $0x8] sm:$0xf]
        %v1533 = vld [vmem:[%s557 + $0xc] sm:$0xf]
        %v1534 = vld [vmem:[%s557 + $0x10] sm:$0xf]
        %v1535 = vld [vmem:[%s557 + $0x14] sm:$0xf]
        %v1536 = vld [vmem:[%s557 + $0x18] sm:$0xf]
        %v1537 = vld [vmem:[%s557 + $0x1c] sm:$0xf]
        %v1538 = vlaneseq
        %v1539 = vshrl.u32 %v1538, 7
        %v1540 = vsub.s32 3, %v1539
        %v1541 = vrot.slane %v698, %v1540
        %v1550 = vunpack.c.l.b16 %v1530
        %v1551 = vunpack.c.l.b16 %v1531
        %v1552 = vunpack.c.l.b16 %v1532
        %v1553 = vunpack.c.l.b16 %v1533
        %v1554 = vunpack.c.l.b16 %v1534
        %v1555 = vunpack.c.l.b16 %v1535
        %v1556 = vunpack.c.l.b16 %v1536
        %v1557 = vunpack.c.l.b16 %v1537
        %v1558 = vpack.c.b16 %v1551, %v1550
        %v1559 = vpack.c.b16 %v1553, %v1552
        %v1560 = vpack.c.b16 %v1555, %v1554
        %v1561 = vpack.c.b16 %v1557, %v1556
        %vm1566 = vcmask 523264
        %v1568 = vsel %vm1566, %v1529, 0
        %1570 = vmatprep.subr.bf16.mxu0 0
        %1571 = vmatpush1.bf16.msra.mxu0 0
        %1572 = vmatprep.subr.bf16.mxu0 0
        %1573 = vmatpush1.bf16.msra.mxu0 0
        %1574 = vmatprep.subr.bf16.mxu0 0
        %1575 = vmatpush1.bf16.msra.mxu0 0
        %1576 = vmatprep.subr.bf16.mxu0 0
        %1577 = vmatpush1.bf16.msra.mxu0 0
        %1578 = vmatprep.subr.bf16.mxu0 0
        %1579 = vmatpush1.bf16.msra.mxu0 %v1561
        %1580 = vmatprep.subr.bf16.mxu0 0
        %1581 = vmatpush1.bf16.msra.mxu0 %v1560
        %1582 = vmatprep.subr.bf16.mxu0 0
        %1583 = vmatpush1.bf16.msra.mxu0 %v1559
        %1584 = vmatprep.subr.bf16.mxu0 0
        %1585 = vmatpush1.bf16.msra.mxu0 %v1558
        %1586 = vmatprep.subr.bf16.mxu0 0
        %1587 = vmatpush2.bf16.msra.mxu0 0
        %1588 = vmatprep.subr.bf16.mxu0 0
        %1589 = vmatpush2.bf16.msra.mxu0 0
        %1590 = vmatprep.subr.bf16.mxu0 0
        %1591 = vmatpush2.bf16.msra.mxu0 0
        %1592 = vmatprep.subr.bf16.mxu0 0
        %1593 = vmatpush2.bf16.msra.mxu0 0
        %1594 = vmatprep.subr.bf16.mxu0 0
        %1595 = vmatpush2.bf16.msra.mxu0 0
        %1596 = vmatprep.subr.bf16.mxu0 0
        %1597 = vmatpush2.bf16.msra.mxu0 0
        %1598 = vmatprep.subr.bf16.mxu0 0
        %1599 = vmatpush2.bf16.msra.mxu0 0
        %1600 = vmatprep.subr.bf16.mxu0 0
        %1601 = vmatpush2.bf16.msra.mxu0 0
        %1602 = vmatprep.mubr.bf16.mxu0 0
        %1603 = vmatmul.mubr.bf16.gmra.mxu0 %v1568
        %v1604 = vpop.f32.mrf.mxu0
        %v1605 = vadd.f32 %v1541, %v1604
        %v1606 = vpop.f32.mrf.mxu0
        %v1607 = vpop.f32.mrf.mxu0
        %v1608 = vpop.f32.mrf.mxu0
        %1609 = vdwg.mxu0
        %v1610 = vadd.f32 %v1605, %v1452
        %v1611 = vsel %vm722, %v1610, 0.0
        %1612 = vadd.xlane.f32.xlu0 %v1611
        %v1613 = vpop.xlane.xlu0 %1612
        %v1614 = vmul.f32 %v1613, %v1432
        %v1615 = vsub.f32 %v1610, %v1614
        %v1616 = vmul.f32 %v1615, %v1615
        %v1617 = vsel %vm722, %v1616, 0.0
        %1618 = vadd.xlane.f32.xlu0 %v1617
        %v1619 = vpop.xlane.xlu0 %1618
        %v1620 = vmul.f32 %v1619, %v1432
        %v1621 = vadd.f32 %v1620, 1e-12
        %v1622 = vrsqrt.pop %v1621
        %v1623 = vmul.f32 %v1615, %v1622
        %v1624 = vlaneseq
        %v1625 = vshrl.u32 %v1624, 7
        %v1626 = vsub.s32 4, %v1625
        %v1627 = vrot.slane %v698, %v1626
        %v1628 = vmul.f32 %v1623, %v1627
        %v1629 = vlaneseq
        %v1630 = vshrl.u32 %v1629, 7
        %v1631 = vsub.s32 5, %v1630
        %v1632 = vrot.slane %v698, %v1631
        %v1633 = vadd.f32 %v1628, %v1632
        %1634 = vst.msk [vmem:[#allocation2] sm:$0xff] %vm722, %v1633
        %p1635 = scmp.eq.s32.totalorder %s39, 1
        // Predicated region
        $region93: #{forward.1} parent=71 // pred_check
          %p1636 = pneg %p1635
        $region94: #{forward.1} parent=71 // pred_check_branch
          %1638 = sbr.rel (%p1636) target = $region96
        $region95: #{forward.1} parent=71 // pred_region
          %v1639 = vld [vmem:[%s10] sm:$0x1]
          %v1640 = vld [vmem:[%s10 + $0x1] sm:$0x1]
          %vm1641 = vcmask 253952
          %v1642 = vsel %vm1641, %v1633, 0.0
          %1643 = vadd.xlane.f32.xlu0 %v1642
          %v1644 = vpop.xlane.xlu0 %1643
          %v1645 = vmul.f32 %v1644, %v1432
          %v1646 = vsub.f32 %v1633, %v1645
          %v1647 = vmul.f32 %v1646, %v1646
          %v1648 = vsel %vm1641, %v1647, 0.0
          %1649 = vadd.xlane.f32.xlu0 %v1648
          %v1650 = vpop.xlane.xlu0 %1649
          %v1651 = vmul.f32 %v1650, %v1432
          %v1652 = vadd.f32 %v1651, 1e-05
          %v1653 = vrsqrt.pop %v1652
          %v1654 = vmul.f32 %v1646, %v1653
          %v1655 = vmul.f32 %v1654, %v1639
          %v1656 = vadd.f32 %v1655, %v1640
          %v1657 = vpack.c.bf16 %v1656, %v1656
          %v1658 = vld [vmem:[#allocation9] sm:$0xf]
          %v1659 = vld [vmem:[#allocation9 + $0x4] sm:$0xf]
          %v1660 = vld [vmem:[#allocation9 + $0x8] sm:$0xf]
          %v1661 = vld [vmem:[#allocation9 + $0xc] sm:$0xf]
          %v1662 = vld [vmem:[%s12] sm:$0x1]
          %v1667 = vunpack.c.l.b16 %v1658
          %v1668 = vunpack.c.l.b16 %v1659
          %v1669 = vunpack.c.l.b16 %v1660
          %v1670 = vunpack.c.l.b16 %v1661
          %v1671 = vpack.c.b16 %v1668, %v1667
          %v1672 = vpack.c.b16 %v1670, %v1669
          %v1676 = vsel %vm722, %v1657, 0
          %1678 = vmatprep.subr.bf16.mxu0 0
          %1679 = vmatpush1.bf16.msra.mxu0 0
          %1680 = vmatprep.subr.bf16.mxu0 0
          %1681 = vmatpush1.bf16.msra.mxu0 0
          %1682 = vmatprep.subr.bf16.mxu0 0
          %1683 = vmatpush1.bf16.msra.mxu0 0
          %1684 = vmatprep.subr.bf16.mxu0 0
          %1685 = vmatpush1.bf16.msra.mxu0 0
          %1686 = vmatprep.subr.bf16.mxu0 0
          %1687 = vmatpush1.bf16.msra.mxu0 0
          %1688 = vmatprep.subr.bf16.mxu0 0
          %1689 = vmatpush1.bf16.msra.mxu0 0
          %1690 = vmatprep.subr.bf16.mxu0 0
          %1691 = vmatpush1.bf16.msra.mxu0 %v1672
          %1692 = vmatprep.subr.bf16.mxu0 0
          %1693 = vmatpush1.bf16.msra.mxu0 %v1671
          %1694 = vmatprep.subr.bf16.mxu0 0
          %1695 = vmatpush2.bf16.msra.mxu0 0
          %1696 = vmatprep.subr.bf16.mxu0 0
          %1697 = vmatpush2.bf16.msra.mxu0 0
          %1698 = vmatprep.subr.bf16.mxu0 0
          %1699 = vmatpush2.bf16.msra.mxu0 0
          %1700 = vmatprep.subr.bf16.mxu0 0
          %1701 = vmatpush2.bf16.msra.mxu0 0
          %1702 = vmatprep.subr.bf16.mxu0 0
          %1703 = vmatpush2.bf16.msra.mxu0 0
          %1704 = vmatprep.subr.bf16.mxu0 0
          %1705 = vmatpush2.bf16.msra.mxu0 0
          %1706 = vmatprep.subr.bf16.mxu0 0
          %1707 = vmatpush2.bf16.msra.mxu0 0
          %1708 = vmatprep.subr.bf16.mxu0 0
          %1709 = vmatpush2.bf16.msra.mxu0 0
          %1710 = vmatprep.mubr.bf16.mxu0 0
          %1711 = vmatmul.mubr.bf16.gmra.mxu0 %v1676
          %v1712 = vpop.f32.mrf.mxu0
          %v1713 = vadd.f32 %v1662, %v1712
          %v1714 = vpop.f32.mrf.mxu0
          %v1715 = vpop.f32.mrf.mxu0
          %v1716 = vpop.f32.mrf.mxu0
          %1717 = vdwg.mxu0
          %v1718 = vadd.f32 %v1713, %v1633
          %1719 = vst.msk [vmem:[%s636] sm:$0x1] %vm1641, %v1718
        $region96: #{forward.1} parent=71 // pred_fallthru
          _
        %s1720 = sand.u32 %s372, 1
        %s1721 = scalar_lea.sflag [#allocation5], %s1720
        %s1722 = sand.u32 %s372, 1
        %s1723 = scalar_lea.vmem [#allocation11], %s1722
        // Predicated region
        $region97: #{forward.1} parent=71 // pred_check
          %p1724 = pneg %p382
        $region98: #{forward.1} parent=71 // pred_check_branch
          %1726 = sbr.rel (%p1724) target = $region100
        $region99: #{forward.1} parent=71 // pred_region
          %s1728 = ssub.s32 16, 16
          %1729 = vsyncadd %s1721, %s1728
          %s1730 = smul.addr %s38, 16
          %s1731 = scalar_lea.hbm %s13, %s1730
          %s1733 = sshll.u32 %s1723, 4
          %s1734 = int_to_ptr.vmem [resolvable:$true] %s1733
          %1736 = dma.vmem_to_hbm [thread:$0]  %s1734, 16, %s1731, %s1721
        $region100: #{forward.1} parent=71 // pred_fallthru
          _
      $region72: #{forward.1} parent=5 // pred_fallthru
        _
      %p1737 = scmp.le.s32.totalorder 2, %s29
      // Predicated region
      $region101: #{forward.1} parent=5 // pred_check
        %p1738 = pneg %p1737
      $region102: #{forward.1} parent=5 // pred_check_branch
        %1740 = sbr.rel (%p1738) target = $region104
      $region103: #{forward.1} parent=5 // pred_region
        %s1741 = ssub.s32 %s29, 2
        // Predicated region
        $region105: #{forward.1} parent=103 // pred_check
          %p1742 = pneg %p388
        $region106: #{forward.1} parent=103 // pred_check_branch
          %1744 = sbr.rel (%p1742) target = $region108
        $region107: #{forward.1} parent=103 // pred_region
          %s1745 = sand.u32 %s373, 1
          %s1746 = scalar_lea.sflag [#allocation5], %s1745
          %s1747 = sand.u32 %s373, 1
          %s1748 = scalar_lea.vmem [#allocation11], %s1747
          %1749 = dma.done %s1746, 16
        $region108: #{forward.1} parent=103 // pred_fallthru
          _
      $region104: #{forward.1} parent=5 // pred_fallthru
        _
    $region6: #{forward.1} parent=1 // loop_footer
      %s33 = sadd.s32 1, %s29
    $region7: #{forward.1} parent=1 // loop_footer_branch
      %28 = sbr.rel target = $region3
    $region8: #{forward.1} parent=1 // loop_exit
      _
    %1750 = vsyncpa [#allocation4], 1
    %s1751 = scalar_lea.sflag [#allocation4], 1
    %1752 = vsyncpa %s1751, 1
    %1753 = vsyncpa [#allocation7], 1
    %s1754 = scalar_lea.sflag [#allocation7], 1
    %1755 = vsyncpa %s1754, 1
    %1756 = vsyncpa [#allocation10], 1
    %1757 = vsyncpa [#allocation5], 1
    %s1758 = scalar_lea.sflag [#allocation5], 1
    %1759 = vsyncpa %s1758, 1

</llo_original>
